<compile_context>
chip_gen: v6e
topology: v6e:2x2x1
jax: 0.10.0
libtpu: 0.0.40
codegen_flags: <defaults>
</compile_context>

<pallas_src>
import math

import jax
import jax.numpy as jnp
from jax.experimental import pallas as pl
from jax.experimental.pallas import tpu as pltpu

EPS = 1e-5
C_PAD = 128                 # padded channel / lane width through the conv stack
VMEM_LIMIT = 32 << 20       # >3x worst-case tile footprint; < physical on all gens

CONV_CFG = [(3, 24, 5, 2), (24, 36, 5, 2), (36, 48, 5, 2), (48, 64, 3, 1), (64, 64, 3, 1)]
LIN_CFG = [(1152, 1164), (1164, 100), (100, 50), (50, 10), (10, 1)]


def _round_up(x, m):
    return ((x + m - 1) // m) * m


def _elu(y):
    # ELU(alpha=1) on the f32 epilogue (exp runs on the otherwise-idle EUP slot).
    # exp(min(y,0)) - 1 kept instead of expm1 for guaranteed Mosaic lowering.
    return jnp.where(y > 0.0, y, jnp.exp(jnp.minimum(y, 0.0)) - 1.0)


# ----------------------------------------------------------------------------
# Pallas kernels
# ----------------------------------------------------------------------------
def _matmul_bias_elu_kernel(x_ref, w_ref, b_ref, o_ref):
    """One conv layer (post-im2col): ELU(x @ W + b). bf16 operands, f32 acc."""
    y = jnp.dot(x_ref[...], w_ref[...], preferred_element_type=jnp.float32)
    y = _elu(y + b_ref[...])
    o_ref[...] = y.astype(o_ref.dtype)


def _mlp_kernel(x_ref, w1, b1, w2, b2, w3, b3, w4, b4, w5, b5, o_ref):
    """Entire Linear stack fused: all weights VMEM-resident, no HBM hops."""
    def layer(h, w_ref, b_ref, elu):
        y = jnp.dot(h, w_ref[...], preferred_element_type=jnp.float32) + b_ref[...]
        return _elu(y) if elu else y

    h = x_ref[...]
    h = layer(h, w1, b1, True).astype(jnp.bfloat16)
    h = layer(h, w2, b2, True).astype(jnp.bfloat16)
    h = layer(h, w3, b3, True).astype(jnp.bfloat16)
    h = layer(h, w4, b4, True).astype(jnp.bfloat16)
    o_ref[...] = layer(h, w5, b5, False)          # last Linear: no BN, no ELU


# ----------------------------------------------------------------------------
# pallas_call wrappers
# ----------------------------------------------------------------------------
def conv_matmul(cols, w, b, tm):
    """cols: (Mp, Kp) bf16, w: (Kp, 128) bf16, b: (1, 128) f32 -> (Mp, 128) bf16."""
    mp, kp = cols.shape
    n = w.shape[1]
    return pl.pallas_call(
        _matmul_bias_elu_kernel,
        grid=(mp // tm,),
        in_specs=[pl.BlockSpec((tm, kp), lambda i: (i, 0)),
                  pl.BlockSpec((kp, n), lambda i: (0, 0)),
                  pl.BlockSpec((1, n), lambda i: (0, 0))],
        out_specs=pl.BlockSpec((tm, n), lambda i: (i, 0)),
        out_shape=jax.ShapeDtypeStruct((mp, n), jnp.bfloat16),
        compiler_params=pltpu.CompilerParams(
            dimension_semantics=("parallel",),
            vmem_limit_bytes=VMEM_LIMIT),
    )(cols, w, b)


def mlp_fused(x, lin_params, tb):
    """x: (Bp, 1152) bf16; lin_params: 5 x (W bf16, b f32) padded -> (Bp, 128) f32."""
    bp, fin = x.shape
    in_specs = [pl.BlockSpec((tb, fin), lambda i: (i, 0))]
    args = [x]
    for w, b in lin_params:
        in_specs.append(pl.BlockSpec(w.shape, lambda i: (0, 0)))
        in_specs.append(pl.BlockSpec(b.shape, lambda i: (0, 0)))
        args.extend((w, b))
    n_out = lin_params[-1][0].shape[1]
    return pl.pallas_call(
        _mlp_kernel,
        grid=(bp // tb,),
        in_specs=in_specs,
        out_specs=pl.BlockSpec((tb, n_out), lambda i: (i, 0)),
        out_shape=jax.ShapeDtypeStruct((bp, n_out), jnp.float32),
        compiler_params=pltpu.CompilerParams(
            dimension_semantics=("parallel",),
            vmem_limit_bytes=VMEM_LIMIT),
    )(*args)


# ----------------------------------------------------------------------------
# Glue: im2col patch extraction (pure JAX reshapes / strided slices)
# ----------------------------------------------------------------------------
def im2col(x_nhwc, kh, kw, stride):
    B, H, W, C = x_nhwc.shape
    Ho = (H - kh) // stride + 1
    Wo = (W - kw) // stride + 1
    cols = []
    for i in range(kh):
        for j in range(kw):
            cols.append(x_nhwc[:, i:i + stride * Ho:stride,
                                  j:j + stride * Wo:stride, :])
    patches = jnp.stack(cols, axis=3)                     # (B,Ho,Wo,kh*kw,C)
    patches = patches.reshape(B * Ho * Wo, kh * kw * C)   # row = one conv window
    return patches, (B, Ho, Wo)


# ----------------------------------------------------------------------------
# Parameters: synthetic torch-like init, then BN folding + padding for Pallas
# ----------------------------------------------------------------------------
def init_params(key):
    params = {"conv": [], "lin": []}
    for cin, cout, k, s in CONV_CFG:
        key, k1, k2 = jax.random.split(key, 3)
        bound = 1.0 / math.sqrt(cin * k * k)
        w = jax.random.uniform(k1, (k, k, cin, cout), jnp.float32, -bound, bound)
        b = jax.random.uniform(k2, (cout,), jnp.float32, -bound, bound)
        bn = (jnp.ones((cout,), jnp.float32), jnp.zeros((cout,), jnp.float32),
              jnp.zeros((cout,), jnp.float32), jnp.ones((cout,), jnp.float32))
        params["conv"].append((w, b) + bn + (k, s))
    for fin, fout in LIN_CFG:
        key, k1, k2 = jax.random.split(key, 3)
        bound = 1.0 / math.sqrt(fin)
        w = jax.random.uniform(k1, (fin, fout), jnp.float32, -bound, bound)
        b = jax.random.uniform(k2, (fout,), jnp.float32, -bound, bound)
        bn = (jnp.ones((fout,), jnp.float32), jnp.zeros((fout,), jnp.float32),
              jnp.zeros((fout,), jnp.float32), jnp.ones((fout,), jnp.float32))
        params["lin"].append((w, b) + bn)
    return params


def prepare_params(params):
    """Fold eval-mode BN into W/b, pad K/N to 128 multiples, cast weights bf16."""
    prep = {"conv": [], "lin": []}
    c_act = CONV_CFG[0][0]                       # channels of incoming activation (3)
    for (w, b, g, be, mu, va, k, s) in params["conv"]:
        cin, cout = w.shape[2], w.shape[3]
        scale = g * jax.lax.rsqrt(va + EPS)
        w_f = w * scale                          # broadcast over the cout axis
        b_f = (b - mu) * scale + be
        kk = k * k * c_act
        kp = _round_up(kk, 128)
        w_e = jnp.zeros((k, k, c_act, cout), jnp.float32).at[:, :, :cin, :].set(w_f)
        w_p = jnp.zeros((kp, C_PAD), jnp.float32).at[:kk, :cout].set(w_e.reshape(kk, cout))
        b_p = jnp.zeros((1, C_PAD), jnp.float32).at[0, :cout].set(b_f)
        prep["conv"].append((w_p.astype(jnp.bfloat16), b_p, k, s, cout, kp))
        c_act = C_PAD                            # activations carry 128 padded channels
    fin_pad = LIN_CFG[0][0]                      # 1152 (flatten output, already dense)
    nlin = len(params["lin"])
    for idx, (w, b, g, be, mu, va) in enumerate(params["lin"]):
        fin, fout = w.shape
        if idx == nlin - 1:                      # last Linear has no BatchNorm
            w_f, b_f = w, b
        else:
            scale = g * jax.lax.rsqrt(va + EPS)
            w_f = w * scale[None, :]
            b_f = (b - mu) * scale + be
        fout_pad = _round_up(fout, 128)
        w_p = jnp.zeros((fin_pad, fout_pad), jnp.float32).at[:fin, :fout].set(w_f)
        b_p = jnp.zeros((1, fout_pad), jnp.float32).at[0, :fout].set(b_f)
        prep["lin"].append((w_p.astype(jnp.bfloat16), b_p))
        fin_pad = fout_pad
    return prep


# ----------------------------------------------------------------------------
# Forward pass (Pallas) and pure-JAX f32 reference
# ----------------------------------------------------------------------------
def nvidia_forward_pallas(prep, x_nchw):
    B = x_nchw.shape[0]
    x = jnp.transpose(x_nchw, (0, 2, 3, 1)).astype(jnp.bfloat16)    # NCHW -> NHWC
    cout_last = CONV_CFG[-1][1]
    for (w_p, b_p, k, s, cout, kp) in prep["conv"]:
        cols, (B_, Ho, Wo) = im2col(x, k, k, s)                     # (M, K) bf16
        M, K = cols.shape
        tm = min(512, _round_up(M, 16))
        mp = _round_up(M, tm)
        cols_p = jnp.pad(cols, ((0, mp - M), (0, kp - K)))
        y = conv_matmul(cols_p, w_p, b_p, tm)                       # (Mp, 128) bf16
        x = y[:M].reshape(B_, Ho, Wo, C_PAD)
        cout_last = cout
    # nn.Flatten on (B, C, H, W): channel-major order; drop padded channels.
    feats = jnp.transpose(x[..., :cout_last], (0, 3, 1, 2)).reshape(B, -1)  # (B, 1152)
    # Dropout(p=0.5): identity in eval mode.
    bp = _round_up(B, 16)
    tb = min(256, bp)
    bp = _round_up(bp, tb)
    xf = jnp.zeros((bp, feats.shape[1]), jnp.bfloat16).at[:B].set(feats)
    out = mlp_fused(xf, prep["lin"], tb)                            # (Bp, 128) f32
    return out[:B, 0]                                               # torch.flatten -> (B,)


def _dense_ref(x, w, b, gamma, beta, mean, var, *, apply_bn, apply_elu):
    y = jnp.dot(x, w) + b[None, :]
    if apply_bn:
        y = (y - mean[None, :]) * jax.lax.rsqrt(var[None, :] + EPS) * gamma[None, :] + beta[None, :]
    if apply_elu:
        y = jnp.where(y > 0.0, y, jnp.exp(jnp.minimum(y, 0.0)) - 1.0)
    return y


def nvidia_forward_ref(params, x_nchw):
    x = jnp.transpose(x_nchw, (0, 2, 3, 1))
    for (w, b, g, be, mu, va, k, s) in params["conv"]:
        cols, (B, Ho, Wo) = im2col(x, k, k, s)
        w2 = w.reshape(k * k * w.shape[2], w.shape[3])
        y = _dense_ref(cols, w2, b, g, be, mu, va, apply_bn=True, apply_elu=True)
        x = y.reshape(B, Ho, Wo, w.shape[3])
    x = jnp.transpose(x, (0, 3, 1, 2)).reshape(x.shape[0], -1)      # (B, 1152)
    nlin = len(params["lin"])
    for idx, (w, b, g, be, mu, va) in enumerate(params["lin"]):
        last = idx == nlin - 1
        x = _dense_ref(x, w, b, g, be, mu, va, apply_bn=not last, apply_elu=not last)
    return x.reshape(-1)


# ----------------------------------------------------------------------------
if __name__ == "__main__":
    key = jax.random.PRNGKey(0)
    key, pkey, xkey = jax.random.split(key, 3)
    params = init_params(pkey)
    prep = prepare_params(params)

    # Linear(1152, ...) forces the conv-stack output to 64*1*18, i.e. the
    # canonical PilotNet input resolution 66x200. Batch kept small (2).
    x = jax.random.normal(xkey, (2, 3, 66, 200), jnp.float32)

    out = jax.block_until_ready(nvidia_forward_pallas(prep, x))
    ref = jax.block_until_ready(nvidia_forward_ref(params, x))

    assert out.shape == (2,), out.shape
    assert bool(jnp.all(jnp.isfinite(out)))
    assert bool(jnp.allclose(out, ref, rtol=5e-2, atol=5e-2)), (out, ref)
    print("KERNEL_OK")
</pallas_src>

<mosaic_0001>
module attributes {stable_mosaic.version = 11 : i64} {
  func.func @_matmul_bias_elu_kernel(%arg0: i32, %arg1: memref<512x128xbf16, #tpu.memory_space<vmem>>, %arg2: memref<128x128xbf16, #tpu.memory_space<vmem>>, %arg3: memref<1x128xf32, #tpu.memory_space<vmem>>, %arg4: memref<512x128xbf16, #tpu.memory_space<vmem>>) attributes {dimension_semantics = [#tpu.dimension_semantics<parallel>], iteration_bounds = array<i64: 12>, scalar_prefetch = 0 : i64, scratch_operands = 0 : i64, tpu.core_type = #tpu.core_type<tc>, window_params = [{transform_indices = @transform_0, window_bounds = array<i64: 512, 128>}, {pipeline_mode = #tpu.pipeline_mode<synchronous>, transform_indices = @transform_1, window_bounds = array<i64: 128, 128>}, {pipeline_mode = #tpu.pipeline_mode<synchronous>, transform_indices = @transform_2, window_bounds = array<i64: 1, 128>}, {transform_indices = @transform_3, window_bounds = array<i64: 512, 128>}]} {
    %c0 = arith.constant 0 : index
    %c0_0 = arith.constant 0 : index
    %0 = vector.load %arg1[%c0, %c0_0] : memref<512x128xbf16, #tpu.memory_space<vmem>>, vector<512x128xbf16>
    %c0_1 = arith.constant 0 : index
    %c0_2 = arith.constant 0 : index
    %1 = vector.load %arg2[%c0_1, %c0_2] : memref<128x128xbf16, #tpu.memory_space<vmem>>, vector<128x128xbf16>
    %cst = arith.constant dense<0.000000e+00> : vector<512x128xf32>
    %2 = tpu.matmul %0, %1, %cst {dimension_numbers = #tpu.dot_dimension_numbers<[1], [0], [0], [1], [0, 0, 1, 1], [], []>} : vector<512x128xbf16>, vector<128x128xbf16>, vector<512x128xf32> -> vector<512x128xf32>
    %c0_3 = arith.constant 0 : index
    %c0_4 = arith.constant 0 : index
    %3 = vector.load %arg3[%c0_3, %c0_4] : memref<1x128xf32, #tpu.memory_space<vmem>>, vector<1x128xf32>
    %4 = vector.broadcast %3 : vector<1x128xf32> to vector<512x128xf32>
    %5 = arith.addf %2, %4 : vector<512x128xf32>
    %cst_5 = arith.constant 0.000000e+00 : f32
    %6 = vector.broadcast %cst_5 : f32 to vector<512x128xf32>
    %7 = arith.cmpf ogt, %5, %6 : vector<512x128xf32>
    %cst_6 = arith.constant 0.000000e+00 : f32
    %8 = vector.broadcast %cst_6 : f32 to vector<512x128xf32>
    %9 = arith.minimumf %5, %8 : vector<512x128xf32>
    %10 = math.exp %9 : vector<512x128xf32>
    %cst_7 = arith.constant 1.000000e+00 : f32
    %11 = vector.broadcast %cst_7 : f32 to vector<512x128xf32>
    %12 = arith.subf %10, %11 : vector<512x128xf32>
    %13 = arith.select %7, %5, %12 : vector<512x128xi1>, vector<512x128xf32>
    %14 = arith.truncf %13 : vector<512x128xf32> to vector<512x128xbf16>
    %c0_8 = arith.constant 0 : index
    %c0_9 = arith.constant 0 : index
    %15 = vector.load %arg4[%c0_8, %c0_9] : memref<512x128xbf16, #tpu.memory_space<vmem>>, vector<512x128xbf16>
    tpu.vector_store %arg4[%c0_8, %c0_9], %14 {strides = array<i32>} : memref<512x128xbf16, #tpu.memory_space<vmem>>, vector<512x128xbf16>,
    return
  }
  func.func @transform_0(%arg0: i32) -> (i32, i32) {
    %c0_i32 = arith.constant 0 : i32
    %c0_i32_0 = arith.constant 0 : i32
    return %arg0, %c0_i32 : i32, i32
  }
  func.func @transform_1(%arg0: i32) -> (i32, i32) {
    %c0_i32 = arith.constant 0 : i32
    %c0_i32_0 = arith.constant 0 : i32
    %c0_i32_1 = arith.constant 0 : i32
    return %c0_i32, %c0_i32_0 : i32, i32
  }
  func.func @transform_2(%arg0: i32) -> (i32, i32) {
    %c0_i32 = arith.constant 0 : i32
    %c0_i32_0 = arith.constant 0 : i32
    %c0_i32_1 = arith.constant 0 : i32
    return %c0_i32, %c0_i32_0 : i32, i32
  }
  func.func @transform_3(%arg0: i32) -> (i32, i32) {
    %c0_i32 = arith.constant 0 : i32
    %c0_i32_0 = arith.constant 0 : i32
    return %arg0, %c0_i32 : i32, i32
  }
}

</mosaic_0001>

<llo_original>
// kernel: tpu_custom_call.1
$region0: #{tpu_custom_call.1}
  #allocation0 [shape = 'u32[]', space=smem, size = 0x4, offset = 0x4, fixed_abs, tag = 'smem constant byte address 0x4 - core index']
  #allocation1 [shape = 'u32[144,128]{1,0:T(1,128)}', space=vmem, size = 0x12000, scoped, tag = 'internal scratch']
  %s0 = inlined_call_operand.hbm [shape: bf16[6144,128], index: 0, kind: input, shape index: {}]
  %s1 = inlined_call_operand.hbm [shape: bf16[128,128], index: 1, kind: input, shape index: {}]
  %s2 = inlined_call_operand.hbm [shape: f32[1,128], index: 2, kind: input, shape index: {}]
  %s3 = inlined_call_operand.hbm [shape: bf16[6144,128], index: 3, kind: output, shape index: {}]
  %s4 = sld [smem:[#allocation0]]
  $region57: #{tpu_custom_call.1} parent=0
    _
  %s6 = ssub.s32 1, %s4
  %s7 = scalar_select 0, %s6, %s4
  $region1: #{tpu_custom_call.1} parent=0
    #allocation2 [shape = 'u8[262144]{0}', space=vmem, size = 0x40000, scoped, tag = 'input window, operand 0']
    #allocation3 [shape = 's32[2]{0}', space=sflag, size = 0x8, scoped, tag = 'scoped memory for tpu_custom_call.1']
    #allocation4 [shape = 's32[2]{0}', space=sflag, size = 0x8, scoped, tag = 'scoped memory for tpu_custom_call.1']
    #allocation5 [shape = 'u8[32768]{0}', space=vmem, size = 0x8000, scoped, tag = 'input window, operand 1, single buffered']
    #allocation6 [shape = 's32[1]{0}', space=sflag, size = 0x4, scoped, tag = 'scoped memory for tpu_custom_call.1']
    #allocation7 [shape = 'u8[512]{0}', space=vmem, size = 0x400, scoped, tag = 'input window, operand 2, single buffered']
    #allocation8 [shape = 'u8[262144]{0}', space=vmem, size = 0x40000, scoped, tag = 'output window, operand 0']
    %8 = vsyncpa [#allocation3], 0
    %s9 = scalar_lea.sflag [#allocation3], 1
    %10 = vsyncpa %s9, 0
    %11 = vsyncpa [#allocation6], 0
    %12 = vsyncpa [#allocation4], 0
    %s13 = scalar_lea.sflag [#allocation4], 1
    %14 = vsyncpa %s13, 0
    loop: start=0, step=1, limit=14
    $region2: #{tpu_custom_call.1} parent=1 // loop_pre_header
      _
    $region3: #{tpu_custom_call.1} parent=1 // loop_header
      %s16 = sphi 0, %s20
      %p17 = scmp.ge.s32.totalorder %s16, 14
      %s26 = sphi 0, %s28
      %s29 = sphi 0, %s26
      %s30 = sphi 0, %s29
      %s46 = sphi 0, %s30
      %s50 = sphi 0, %s50
      %s52 = sphi 0, %s50
      %s53 = sphi 0, %s52
      %s67 = sphi 0, %s53
      %s71 = sphi 0, %s71
      %s73 = sphi 0, %s71
      %s74 = sphi 0, %s73
      %s88 = sphi 0, %s74
      %s94 = sphi 0, %s96
      %s97 = sphi 0, %s94
      %s98 = sphi 0, %s97
      %s114 = sphi 0, %s98
    $region4: #{tpu_custom_call.1} parent=1 // loop_header_branch
      %19 = sbr.rel (%p17) target = $region8
    $region5: #{tpu_custom_call.1} parent=1 // loop_body
      %s21 = ssub.s32 %s16, 1
      %s22 = ssub.s32 %s16, 2
      %s23 = sadd.s32 %s16, 1
      %s24 = ssub.s32 %s16, %s23
      %p25 = scmp.eq.s32.totalorder %s24, 0
      %s27 = sadd.s32 %s26, 1
      %s28 = scalar_select %p25, %s26, %s27
      %p31 = pneg %p25
      %p32 = scmp.eq.s32.totalorder %s16, 11
      %p33 = por %p31, %p32
      %p34 = scmp.ne.s32.totalorder %s26, %s29
      %p35 = scmp.eq.s32.totalorder %s16, 0
      %p36 = por %p34, %p35
      %p37 = scmp.ne.s32.totalorder %s26, %s29
      %p38 = scmp.eq.s32.totalorder %s21, 11
      %p39 = por %p37, %p38
      %p40 = scmp.ne.s32.totalorder %s29, %s30
      %p41 = scmp.eq.s32.totalorder %s21, 0
      %p42 = por %p40, %p41
      %p43 = scmp.ne.s32.totalorder %s29, %s30
      %p44 = scmp.eq.s32.totalorder %s22, 11
      %p45 = por %p43, %p44
      %p47 = scmp.ne.s32.totalorder %s30, %s46
      %p48 = scmp.eq.s32.totalorder %s22, 0
      %p49 = por %p47, %p48
      %s51 = sadd.s32 %s50, 1
      %p54 = scmp.eq.s32.totalorder %s16, 11
      %p55 = scmp.ne.s32.totalorder %s50, %s52
      %p56 = scmp.eq.s32.totalorder %s16, 0
      %p57 = por %p55, %p56
      %p58 = scmp.ne.s32.totalorder %s50, %s52
      %p59 = scmp.eq.s32.totalorder %s21, 11
      %p60 = por %p58, %p59
      %p61 = scmp.ne.s32.totalorder %s52, %s53
      %p62 = scmp.eq.s32.totalorder %s21, 0
      %p63 = por %p61, %p62
      %p64 = scmp.ne.s32.totalorder %s52, %s53
      %p65 = scmp.eq.s32.totalorder %s22, 11
      %p66 = por %p64, %p65
      %p68 = scmp.ne.s32.totalorder %s53, %s67
      %p69 = scmp.eq.s32.totalorder %s22, 0
      %p70 = por %p68, %p69
      %s72 = sadd.s32 %s71, 1
      %p75 = scmp.eq.s32.totalorder %s16, 11
      %p76 = scmp.ne.s32.totalorder %s71, %s73
      %p77 = scmp.eq.s32.totalorder %s16, 0
      %p78 = por %p76, %p77
      %p79 = scmp.ne.s32.totalorder %s71, %s73
      %p80 = scmp.eq.s32.totalorder %s21, 11
      %p81 = por %p79, %p80
      %p82 = scmp.ne.s32.totalorder %s73, %s74
      %p83 = scmp.eq.s32.totalorder %s21, 0
      %p84 = por %p82, %p83
      %p85 = scmp.ne.s32.totalorder %s73, %s74
      %p86 = scmp.eq.s32.totalorder %s22, 11
      %p87 = por %p85, %p86
      %p89 = scmp.ne.s32.totalorder %s74, %s88
      %p90 = scmp.eq.s32.totalorder %s22, 0
      %p91 = por %p89, %p90
      %s92 = ssub.s32 %s16, %s23
      %p93 = scmp.eq.s32.totalorder %s92, 0
      %s95 = sadd.s32 %s94, 1
      %s96 = scalar_select %p93, %s94, %s95
      %p99 = pneg %p93
      %p100 = scmp.eq.s32.totalorder %s16, 11
      %p101 = por %p99, %p100
      %p102 = scmp.ne.s32.totalorder %s94, %s97
      %p103 = scmp.eq.s32.totalorder %s16, 0
      %p104 = por %p102, %p103
      %p105 = scmp.ne.s32.totalorder %s94, %s97
      %p106 = scmp.eq.s32.totalorder %s21, 11
      %p107 = por %p105, %p106
      %p108 = scmp.ne.s32.totalorder %s97, %s98
      %p109 = scmp.eq.s32.totalorder %s21, 0
      %p110 = por %p108, %p109
      %p111 = scmp.ne.s32.totalorder %s97, %s98
      %p112 = scmp.eq.s32.totalorder %s22, 11
      %p113 = por %p111, %p112
      %p115 = scmp.ne.s32.totalorder %s98, %s114
      %p116 = scmp.eq.s32.totalorder %s22, 0
      %p117 = por %p115, %p116
      %p118 = scmp.le.s32.totalorder 1, %s16
      %p119 = scmp.lt.s32.totalorder %s16, 13
      %p120 = pnand %p118, %p119
      %p121 = pneg %p120
      // Predicated region
      $region9: #{tpu_custom_call.1} parent=5 // pred_check
        _
      $region10: #{tpu_custom_call.1} parent=5 // pred_check_branch
        %123 = sbr.rel (%p120) target = $region12
      $region11: #{tpu_custom_call.1} parent=5 // pred_region
        %s124 = ssub.s32 %s16, 1
        // Predicated region
        $region13: #{tpu_custom_call.1} parent=11 // pred_check
          %p125 = pneg %p63
        $region14: #{tpu_custom_call.1} parent=11 // pred_check_branch
          %127 = sbr.rel (%p125) target = $region16
        $region15: #{tpu_custom_call.1} parent=11 // pred_region
          %s129 = ssub.s32 1024, 1024
          %130 = vsyncadd [#allocation6], %s129
          %s131 = sshll.u32 [#allocation5], 4
          %s132 = int_to_ptr.vmem [resolvable:$true] %s131
          %137 = dma.hbm_to_vmem [thread:$0]  %s1, 1024, %s132, [#allocation6], 64, 64, 4
        $region16: #{tpu_custom_call.1} parent=11 // pred_fallthru
          _
        // Predicated region
        $region17: #{tpu_custom_call.1} parent=11 // pred_check
          %p138 = pneg %p84
        $region18: #{tpu_custom_call.1} parent=11 // pred_check_branch
          %140 = sbr.rel (%p138) target = $region20
        $region19: #{tpu_custom_call.1} parent=11 // pred_region
          %s142 = ssub.s32 16, 16
          %143 = vsyncadd [#allocation6], %s142
          %s145 = sshll.u32 [#allocation7], 4
          %s146 = int_to_ptr.vmem [resolvable:$true] %s145
          %148 = dma.hbm_to_vmem [thread:$0]  %s2, 16, %s146, [#allocation6]
        $region20: #{tpu_custom_call.1} parent=11 // pred_fallthru
          _
      $region12: #{tpu_custom_call.1} parent=5 // pred_fallthru
        _
      %p149 = scmp.lt.s32.totalorder %s16, 12
      // Predicated region
      $region21: #{tpu_custom_call.1} parent=5 // pred_check
        %p150 = pneg %p149
      $region22: #{tpu_custom_call.1} parent=5 // pred_check_branch
        %152 = sbr.rel (%p150) target = $region24
      $region23: #{tpu_custom_call.1} parent=5 // pred_region
        // Predicated region
        $region25: #{tpu_custom_call.1} parent=23 // pred_check
          %p153 = pneg %p36
        $region26: #{tpu_custom_call.1} parent=23 // pred_check_branch
          %155 = sbr.rel (%p153) target = $region28
        $region27: #{tpu_custom_call.1} parent=23 // pred_region
          %s156 = sand.u32 %s26, 1
          %s157 = scalar_lea.sflag [#allocation3], %s156
          %s158 = sand.u32 %s26, 1
          %s159 = smul.addr %s158, 256
          %s160 = scalar_lea.vmem [#allocation2], %s159
          %s161 = smul.u32 64, %s16
          %s163 = ssub.s32 4096, 4096
          %164 = vsyncadd %s157, %s163
          %s165 = smul.addr %s161, 64
          %s166 = scalar_lea.hbm %s0, %s165
          %s167 = sshll.u32 %s160, 4
          %s168 = int_to_ptr.vmem [resolvable:$true] %s167
          %173 = dma.hbm_to_vmem [thread:$0]  %s166, 4096, %s168, %s157, 64, 64, 4
        $region28: #{tpu_custom_call.1} parent=23 // pred_fallthru
          _
      $region24: #{tpu_custom_call.1} parent=5 // pred_fallthru
        _
      %p174 = scmp.le.s32.totalorder 1, %s16
      %p175 = scmp.lt.s32.totalorder %s16, 13
      %p176 = pnand %p174, %p175
      %p177 = pneg %p176
      // Predicated region
      $region29: #{tpu_custom_call.1} parent=5 // pred_check
        _
      $region30: #{tpu_custom_call.1} parent=5 // pred_check_branch
        %179 = sbr.rel (%p176) target = $region32
      $region31: #{tpu_custom_call.1} parent=5 // pred_region
        %s180 = ssub.s32 %s16, 1
        %s181 = sand.u32 %s29, 1
        %s182 = scalar_lea.sflag [#allocation3], %s181
        %s183 = sand.u32 %s29, 1
        %s184 = smul.addr %s183, 256
        %s185 = scalar_lea.vmem [#allocation2], %s184
        // Predicated region
        $region33: #{tpu_custom_call.1} parent=31 // pred_check
          %p186 = pneg %p42
        $region34: #{tpu_custom_call.1} parent=31 // pred_check_branch
          %188 = sbr.rel (%p186) target = $region36
        $region35: #{tpu_custom_call.1} parent=31 // pred_region
          %189 = dma.done %s182, 4096
        $region36: #{tpu_custom_call.1} parent=31 // pred_fallthru
          _
        // Predicated region
        $region37: #{tpu_custom_call.1} parent=31 // pred_check
          %p190 = pneg %p63
        $region38: #{tpu_custom_call.1} parent=31 // pred_check_branch
          %192 = sbr.rel (%p190) target = $region40
        $region39: #{tpu_custom_call.1} parent=31 // pred_region
          %193 = dma.done [#allocation6], 1024
        $region40: #{tpu_custom_call.1} parent=31 // pred_fallthru
          _
        // Predicated region
        $region41: #{tpu_custom_call.1} parent=31 // pred_check
          %p194 = pneg %p84
        $region42: #{tpu_custom_call.1} parent=31 // pred_check_branch
          %196 = sbr.rel (%p194) target = $region44
        $region43: #{tpu_custom_call.1} parent=31 // pred_region
          %197 = dma.done [#allocation6], 16
        $region44: #{tpu_custom_call.1} parent=31 // pred_fallthru
          _
        %s198 = sand.u32 %s29, 1
        %s199 = scalar_lea.sflag [#allocation3], %s198
        %s200 = sand.u32 %s29, 1
        %s201 = smul.addr %s200, 256
        %s202 = scalar_lea.vmem [#allocation2], %s201
        %p203 = pneg %p42
        %p204 = pneg %p39
        %p205 = pneg %p63
        %p206 = pneg %p60
        %p207 = pneg %p84
        %p208 = pneg %p81
        %p209 = pneg %p110
        %p210 = pneg %p107
        %s211 = sand.u32 %s97, 1
        %s212 = scalar_lea.sflag [#allocation4], %s211
        %s213 = sand.u32 %s97, 1
        %s214 = smul.addr %s213, 256
        %s215 = scalar_lea.vmem [#allocation8], %s214
        %s216 = smul.u32 64, %s21
        %s217 = smul.u32 64, %s21
        %v219 = vld [vmem:[%s185] sm:$0xf]
        %v220 = vld [vmem:[%s185 + $0x4] sm:$0xf]
        %v221 = vld [vmem:[%s185 + $0x8] sm:$0xf]
        %v222 = vld [vmem:[%s185 + $0xc] sm:$0xf]
        %v223 = vld [vmem:[%s185 + $0x10] sm:$0xf]
        %v224 = vld [vmem:[%s185 + $0x14] sm:$0xf]
        %v225 = vld [vmem:[%s185 + $0x18] sm:$0xf]
        %v226 = vld [vmem:[%s185 + $0x1c] sm:$0xf]
        %v227 = vld [vmem:[%s185 + $0x20] sm:$0xf]
        %v228 = vld [vmem:[%s185 + $0x24] sm:$0xf]
        %v229 = vld [vmem:[%s185 + $0x28] sm:$0xf]
        %v230 = vld [vmem:[%s185 + $0x2c] sm:$0xf]
        %v231 = vld [vmem:[%s185 + $0x30] sm:$0xf]
        %v232 = vld [vmem:[%s185 + $0x34] sm:$0xf]
        %v233 = vld [vmem:[%s185 + $0x38] sm:$0xf]
        %v234 = vld [vmem:[%s185 + $0x3c] sm:$0xf]
        %v235 = vld [vmem:[%s185 + $0x40] sm:$0xf]
        %v236 = vld [vmem:[%s185 + $0x44] sm:$0xf]
        %v237 = vld [vmem:[%s185 + $0x48] sm:$0xf]
        %v238 = vld [vmem:[%s185 + $0x4c] sm:$0xf]
        %v239 = vld [vmem:[%s185 + $0x50] sm:$0xf]
        %v240 = vld [vmem:[%s185 + $0x54] sm:$0xf]
        %v241 = vld [vmem:[%s185 + $0x58] sm:$0xf]
        %v242 = vld [vmem:[%s185 + $0x5c] sm:$0xf]
        %v243 = vld [vmem:[%s185 + $0x60] sm:$0xf]
        %v244 = vld [vmem:[%s185 + $0x64] sm:$0xf]
        %v245 = vld [vmem:[%s185 + $0x68] sm:$0xf]
        %v246 = vld [vmem:[%s185 + $0x6c] sm:$0xf]
        %v247 = vld [vmem:[%s185 + $0x70] sm:$0xf]
        %v248 = vld [vmem:[%s185 + $0x74] sm:$0xf]
        %v249 = vld [vmem:[%s185 + $0x78] sm:$0xf]
        %v250 = vld [vmem:[%s185 + $0x7c] sm:$0xf]
        %v251 = vld [vmem:[%s185 + $0x80] sm:$0xf]
        %v252 = vld [vmem:[%s185 + $0x84] sm:$0xf]
        %v253 = vld [vmem:[%s185 + $0x88] sm:$0xf]
        %v254 = vld [vmem:[%s185 + $0x8c] sm:$0xf]
        %v255 = vld [vmem:[%s185 + $0x90] sm:$0xf]
        %v256 = vld [vmem:[%s185 + $0x94] sm:$0xf]
        %v257 = vld [vmem:[%s185 + $0x98] sm:$0xf]
        %v258 = vld [vmem:[%s185 + $0x9c] sm:$0xf]
        %v259 = vld [vmem:[%s185 + $0xa0] sm:$0xf]
        %v260 = vld [vmem:[%s185 + $0xa4] sm:$0xf]
        %v261 = vld [vmem:[%s185 + $0xa8] sm:$0xf]
        %v262 = vld [vmem:[%s185 + $0xac] sm:$0xf]
        %v263 = vld [vmem:[%s185 + $0xb0] sm:$0xf]
        %v264 = vld [vmem:[%s185 + $0xb4] sm:$0xf]
        %v265 = vld [vmem:[%s185 + $0xb8] sm:$0xf]
        %v266 = vld [vmem:[%s185 + $0xbc] sm:$0xf]
        %v267 = vld [vmem:[%s185 + $0xc0] sm:$0xf]
        %v268 = vld [vmem:[%s185 + $0xc4] sm:$0xf]
        %v269 = vld [vmem:[%s185 + $0xc8] sm:$0xf]
        %v270 = vld [vmem:[%s185 + $0xcc] sm:$0xf]
        %v271 = vld [vmem:[%s185 + $0xd0] sm:$0xf]
        %v272 = vld [vmem:[%s185 + $0xd4] sm:$0xf]
        %v273 = vld [vmem:[%s185 + $0xd8] sm:$0xf]
        %v274 = vld [vmem:[%s185 + $0xdc] sm:$0xf]
        %v275 = vld [vmem:[%s185 + $0xe0] sm:$0xf]
        %v276 = vld [vmem:[%s185 + $0xe4] sm:$0xf]
        %v277 = vld [vmem:[%s185 + $0xe8] sm:$0xf]
        %v278 = vld [vmem:[%s185 + $0xec] sm:$0xf]
        %v279 = vld [vmem:[%s185 + $0xf0] sm:$0xf]
        %v280 = vld [vmem:[%s185 + $0xf4] sm:$0xf]
        %v281 = vld [vmem:[%s185 + $0xf8] sm:$0xf]
        %v282 = vld [vmem:[%s185 + $0xfc] sm:$0xf]
        %v283 = vld [vmem:[#allocation5] sm:$0xf]
        %v284 = vld [vmem:[#allocation5 + $0x4] sm:$0xf]
        %v285 = vld [vmem:[#allocation5 + $0x8] sm:$0xf]
        %v286 = vld [vmem:[#allocation5 + $0xc] sm:$0xf]
        %v287 = vld [vmem:[#allocation5 + $0x10] sm:$0xf]
        %v288 = vld [vmem:[#allocation5 + $0x14] sm:$0xf]
        %v289 = vld [vmem:[#allocation5 + $0x18] sm:$0xf]
        %v290 = vld [vmem:[#allocation5 + $0x1c] sm:$0xf]
        %v291 = vld [vmem:[#allocation5 + $0x20] sm:$0xf]
        %v292 = vld [vmem:[#allocation5 + $0x24] sm:$0xf]
        %v293 = vld [vmem:[#allocation5 + $0x28] sm:$0xf]
        %v294 = vld [vmem:[#allocation5 + $0x2c] sm:$0xf]
        %v295 = vld [vmem:[#allocation5 + $0x30] sm:$0xf]
        %v296 = vld [vmem:[#allocation5 + $0x34] sm:$0xf]
        %v297 = vld [vmem:[#allocation5 + $0x38] sm:$0xf]
        %v298 = vld [vmem:[#allocation5 + $0x3c] sm:$0xf]
        %v299 = vld [vmem:[#allocation7] sm:$0x1]
        %v301 = vlaneseq
        %v302 = vshrl.u32 %v301, 7
        %v303 = vsub.s32 0, %v302
        %v304 = vrot.slane %v299, %v303
        %v370 = vunpack.c.l.b16 %v219
        %v371 = vunpack.c.l.b16 %v220
        %v372 = vunpack.c.l.b16 %v221
        %v373 = vunpack.c.l.b16 %v222
        %v374 = vunpack.c.l.b16 %v223
        %v375 = vunpack.c.l.b16 %v224
        %v376 = vunpack.c.l.b16 %v225
        %v377 = vunpack.c.l.b16 %v226
        %v378 = vunpack.c.l.b16 %v227
        %v379 = vunpack.c.l.b16 %v228
        %v380 = vunpack.c.l.b16 %v229
        %v381 = vunpack.c.l.b16 %v230
        %v382 = vunpack.c.l.b16 %v231
        %v383 = vunpack.c.l.b16 %v232
        %v384 = vunpack.c.l.b16 %v233
        %v385 = vunpack.c.l.b16 %v234
        %v386 = vunpack.c.l.b16 %v235
        %v387 = vunpack.c.l.b16 %v236
        %v388 = vunpack.c.l.b16 %v237
        %v389 = vunpack.c.l.b16 %v238
        %v390 = vunpack.c.l.b16 %v239
        %v391 = vunpack.c.l.b16 %v240
        %v392 = vunpack.c.l.b16 %v241
        %v393 = vunpack.c.l.b16 %v242
        %v394 = vunpack.c.l.b16 %v243
        %v395 = vunpack.c.l.b16 %v244
        %v396 = vunpack.c.l.b16 %v245
        %v397 = vunpack.c.l.b16 %v246
        %v398 = vunpack.c.l.b16 %v247
        %v399 = vunpack.c.l.b16 %v248
        %v400 = vunpack.c.l.b16 %v249
        %v401 = vunpack.c.l.b16 %v250
        %v402 = vunpack.c.l.b16 %v251
        %v403 = vunpack.c.l.b16 %v252
        %v404 = vunpack.c.l.b16 %v253
        %v405 = vunpack.c.l.b16 %v254
        %v406 = vunpack.c.l.b16 %v255
        %v407 = vunpack.c.l.b16 %v256
        %v408 = vunpack.c.l.b16 %v257
        %v409 = vunpack.c.l.b16 %v258
        %v410 = vunpack.c.l.b16 %v259
        %v411 = vunpack.c.l.b16 %v260
        %v412 = vunpack.c.l.b16 %v261
        %v413 = vunpack.c.l.b16 %v262
        %v414 = vunpack.c.l.b16 %v263
        %v415 = vunpack.c.l.b16 %v264
        %v416 = vunpack.c.l.b16 %v265
        %v417 = vunpack.c.l.b16 %v266
        %v418 = vunpack.c.l.b16 %v267
        %v419 = vunpack.c.l.b16 %v268
        %v420 = vunpack.c.l.b16 %v269
        %v421 = vunpack.c.l.b16 %v270
        %v422 = vunpack.c.l.b16 %v271
        %v423 = vunpack.c.l.b16 %v272
        %v424 = vunpack.c.l.b16 %v273
        %v425 = vunpack.c.l.b16 %v274
        %v426 = vunpack.c.l.b16 %v275
        %v427 = vunpack.c.l.b16 %v276
        %v428 = vunpack.c.l.b16 %v277
        %v429 = vunpack.c.l.b16 %v278
        %v430 = vunpack.c.l.b16 %v279
        %v431 = vunpack.c.l.b16 %v280
        %v432 = vunpack.c.l.b16 %v281
        %v433 = vunpack.c.l.b16 %v282
        %v434 = vpack.c.b16 %v371, %v370
        %v435 = vpack.c.b16 %v373, %v372
        %v436 = vpack.c.b16 %v375, %v374
        %v437 = vpack.c.b16 %v377, %v376
        %v438 = vpack.c.b16 %v379, %v378
        %v439 = vpack.c.b16 %v381, %v380
        %v440 = vpack.c.b16 %v383, %v382
        %v441 = vpack.c.b16 %v385, %v384
        %v442 = vpack.c.b16 %v387, %v386
        %v443 = vpack.c.b16 %v389, %v388
        %v444 = vpack.c.b16 %v391, %v390
        %v445 = vpack.c.b16 %v393, %v392
        %v446 = vpack.c.b16 %v395, %v394
        %v447 = vpack.c.b16 %v397, %v396
        %v448 = vpack.c.b16 %v399, %v398
        %v449 = vpack.c.b16 %v401, %v400
        %v450 = vpack.c.b16 %v403, %v402
        %v451 = vpack.c.b16 %v405, %v404
        %v452 = vpack.c.b16 %v407, %v406
        %v453 = vpack.c.b16 %v409, %v408
        %v454 = vpack.c.b16 %v411, %v410
        %v455 = vpack.c.b16 %v413, %v412
        %v456 = vpack.c.b16 %v415, %v414
        %v457 = vpack.c.b16 %v417, %v416
        %v458 = vpack.c.b16 %v419, %v418
        %v459 = vpack.c.b16 %v421, %v420
        %v460 = vpack.c.b16 %v423, %v422
        %v461 = vpack.c.b16 %v425, %v424
        %v462 = vpack.c.b16 %v427, %v426
        %v463 = vpack.c.b16 %v429, %v428
        %v464 = vpack.c.b16 %v431, %v430
        %v465 = vpack.c.b16 %v433, %v432
        %v514 = vunpack.c.l.b16 %v283
        %v515 = vunpack.c.l.b16 %v284
        %v516 = vunpack.c.l.b16 %v285
        %v517 = vunpack.c.l.b16 %v286
        %v518 = vunpack.c.l.b16 %v287
        %v519 = vunpack.c.l.b16 %v288
        %v520 = vunpack.c.l.b16 %v289
        %v521 = vunpack.c.l.b16 %v290
        %v522 = vunpack.c.l.b16 %v291
        %v523 = vunpack.c.l.b16 %v292
        %v524 = vunpack.c.l.b16 %v293
        %v525 = vunpack.c.l.b16 %v294
        %v526 = vunpack.c.l.b16 %v295
        %v527 = vunpack.c.l.b16 %v296
        %v528 = vunpack.c.l.b16 %v297
        %v529 = vunpack.c.l.b16 %v298
        %v530 = vpack.c.b16 %v515, %v514
        %v531 = vpack.c.b16 %v517, %v516
        %v532 = vpack.c.b16 %v519, %v518
        %v533 = vpack.c.b16 %v521, %v520
        %v534 = vpack.c.b16 %v523, %v522
        %v535 = vpack.c.b16 %v525, %v524
        %v536 = vpack.c.b16 %v527, %v526
        %v537 = vpack.c.b16 %v529, %v528
        %546 = vmatprep.subr.bf16.mxu0 0
        %547 = vmatpush1.bf16.msra.mxu0 %v537
        %548 = vmatprep.subr.bf16.mxu0 0
        %549 = vmatpush1.bf16.msra.mxu0 %v536
        %550 = vmatprep.subr.bf16.mxu0 0
        %551 = vmatpush1.bf16.msra.mxu0 %v535
        %552 = vmatprep.subr.bf16.mxu0 0
        %553 = vmatpush1.bf16.msra.mxu0 %v534
        %554 = vmatprep.subr.bf16.mxu0 0
        %555 = vmatpush1.bf16.msra.mxu0 %v533
        %556 = vmatprep.subr.bf16.mxu0 0
        %557 = vmatpush1.bf16.msra.mxu0 %v532
        %558 = vmatprep.subr.bf16.mxu0 0
        %559 = vmatpush1.bf16.msra.mxu0 %v531
        %560 = vmatprep.subr.bf16.mxu0 0
        %561 = vmatpush1.bf16.msra.mxu0 %v530
        %562 = vmatprep.subr.bf16.mxu0 0
        %563 = vmatpush2.bf16.msra.mxu0 0
        %564 = vmatprep.subr.bf16.mxu0 0
        %565 = vmatpush2.bf16.msra.mxu0 0
        %566 = vmatprep.subr.bf16.mxu0 0
        %567 = vmatpush2.bf16.msra.mxu0 0
        %568 = vmatprep.subr.bf16.mxu0 0
        %569 = vmatpush2.bf16.msra.mxu0 0
        %570 = vmatprep.subr.bf16.mxu0 0
        %571 = vmatpush2.bf16.msra.mxu0 0
        %572 = vmatprep.subr.bf16.mxu0 0
        %573 = vmatpush2.bf16.msra.mxu0 0
        %574 = vmatprep.subr.bf16.mxu0 0
        %575 = vmatpush2.bf16.msra.mxu0 0
        %576 = vmatprep.subr.bf16.mxu0 0
        %577 = vmatpush2.bf16.msra.mxu0 0
        %578 = vmatprep.mubr.bf16.mxu0 0
        %579 = vmatmul.mubr.bf16.gmra.mxu0 %v434
        %v580 = vpop.f32.mrf.mxu0
        %v581 = vadd.f32 %v304, %v580
        %v582 = vpop.f32.mrf.mxu0
        %v583 = vpop.f32.mrf.mxu0
        %v584 = vadd.f32 %v304, %v583
        %v585 = vpop.f32.mrf.mxu0
        %586 = vmatprep.mubr.bf16.mxu0 0
        %587 = vmatmul.mubr.bf16.gmra.mxu0 %v435
        %v588 = vpop.f32.mrf.mxu0
        %v589 = vadd.f32 %v304, %v588
        %v590 = vpop.f32.mrf.mxu0
        %v591 = vpop.f32.mrf.mxu0
        %v592 = vadd.f32 %v304, %v591
        %v593 = vpop.f32.mrf.mxu0
        %594 = vmatprep.mubr.bf16.mxu0 0
        %595 = vmatmul.mubr.bf16.gmra.mxu0 %v436
        %v596 = vpop.f32.mrf.mxu0
        %v597 = vadd.f32 %v304, %v596
        %v598 = vpop.f32.mrf.mxu0
        %v599 = vpop.f32.mrf.mxu0
        %v600 = vadd.f32 %v304, %v599
        %v601 = vpop.f32.mrf.mxu0
        %602 = vmatprep.mubr.bf16.mxu0 0
        %603 = vmatmul.mubr.bf16.gmra.mxu0 %v437
        %v604 = vpop.f32.mrf.mxu0
        %v605 = vadd.f32 %v304, %v604
        %v606 = vpop.f32.mrf.mxu0
        %v607 = vpop.f32.mrf.mxu0
        %v608 = vadd.f32 %v304, %v607
        %v609 = vpop.f32.mrf.mxu0
        %610 = vmatprep.mubr.bf16.mxu0 0
        %611 = vmatmul.mubr.bf16.gmra.mxu0 %v438
        %v612 = vpop.f32.mrf.mxu0
        %v613 = vadd.f32 %v304, %v612
        %v614 = vpop.f32.mrf.mxu0
        %v615 = vpop.f32.mrf.mxu0
        %v616 = vadd.f32 %v304, %v615
        %v617 = vpop.f32.mrf.mxu0
        %618 = vmatprep.mubr.bf16.mxu0 0
        %619 = vmatmul.mubr.bf16.gmra.mxu0 %v439
        %v620 = vpop.f32.mrf.mxu0
        %v621 = vadd.f32 %v304, %v620
        %v622 = vpop.f32.mrf.mxu0
        %v623 = vpop.f32.mrf.mxu0
        %v624 = vadd.f32 %v304, %v623
        %v625 = vpop.f32.mrf.mxu0
        %626 = vmatprep.mubr.bf16.mxu0 0
        %627 = vmatmul.mubr.bf16.gmra.mxu0 %v440
        %v628 = vpop.f32.mrf.mxu0
        %v629 = vadd.f32 %v304, %v628
        %v630 = vpop.f32.mrf.mxu0
        %v631 = vpop.f32.mrf.mxu0
        %v632 = vadd.f32 %v304, %v631
        %v633 = vpop.f32.mrf.mxu0
        %634 = vmatprep.mubr.bf16.mxu0 0
        %635 = vmatmul.mubr.bf16.gmra.mxu0 %v441
        %v636 = vpop.f32.mrf.mxu0
        %v637 = vadd.f32 %v304, %v636
        %v638 = vpop.f32.mrf.mxu0
        %v639 = vpop.f32.mrf.mxu0
        %v640 = vadd.f32 %v304, %v639
        %v641 = vpop.f32.mrf.mxu0
        %642 = vmatprep.mubr.bf16.mxu0 0
        %643 = vmatmul.mubr.bf16.gmra.mxu0 %v442
        %v644 = vpop.f32.mrf.mxu0
        %v645 = vadd.f32 %v304, %v644
        %v646 = vpop.f32.mrf.mxu0
        %v647 = vpop.f32.mrf.mxu0
        %v648 = vadd.f32 %v304, %v647
        %v649 = vpop.f32.mrf.mxu0
        %650 = vmatprep.mubr.bf16.mxu0 0
        %651 = vmatmul.mubr.bf16.gmra.mxu0 %v443
        %v652 = vpop.f32.mrf.mxu0
        %v653 = vadd.f32 %v304, %v652
        %v654 = vpop.f32.mrf.mxu0
        %v655 = vpop.f32.mrf.mxu0
        %v656 = vadd.f32 %v304, %v655
        %v657 = vpop.f32.mrf.mxu0
        %658 = vmatprep.mubr.bf16.mxu0 0
        %659 = vmatmul.mubr.bf16.gmra.mxu0 %v444
        %v660 = vpop.f32.mrf.mxu0
        %v661 = vadd.f32 %v304, %v660
        %v662 = vpop.f32.mrf.mxu0
        %v663 = vpop.f32.mrf.mxu0
        %v664 = vadd.f32 %v304, %v663
        %v665 = vpop.f32.mrf.mxu0
        %666 = vmatprep.mubr.bf16.mxu0 0
        %667 = vmatmul.mubr.bf16.gmra.mxu0 %v445
        %v668 = vpop.f32.mrf.mxu0
        %v669 = vadd.f32 %v304, %v668
        %v670 = vpop.f32.mrf.mxu0
        %v671 = vpop.f32.mrf.mxu0
        %v672 = vadd.f32 %v304, %v671
        %v673 = vpop.f32.mrf.mxu0
        %674 = vmatprep.mubr.bf16.mxu0 0
        %675 = vmatmul.mubr.bf16.gmra.mxu0 %v446
        %v676 = vpop.f32.mrf.mxu0
        %v677 = vadd.f32 %v304, %v676
        %v678 = vpop.f32.mrf.mxu0
        %v679 = vpop.f32.mrf.mxu0
        %v680 = vadd.f32 %v304, %v679
        %v681 = vpop.f32.mrf.mxu0
        %682 = vmatprep.mubr.bf16.mxu0 0
        %683 = vmatmul.mubr.bf16.gmra.mxu0 %v447
        %v684 = vpop.f32.mrf.mxu0
        %v685 = vadd.f32 %v304, %v684
        %v686 = vpop.f32.mrf.mxu0
        %v687 = vpop.f32.mrf.mxu0
        %v688 = vadd.f32 %v304, %v687
        %v689 = vpop.f32.mrf.mxu0
        %690 = vmatprep.mubr.bf16.mxu0 0
        %691 = vmatmul.mubr.bf16.gmra.mxu0 %v448
        %v692 = vpop.f32.mrf.mxu0
        %v693 = vadd.f32 %v304, %v692
        %v694 = vpop.f32.mrf.mxu0
        %v695 = vpop.f32.mrf.mxu0
        %v696 = vadd.f32 %v304, %v695
        %v697 = vpop.f32.mrf.mxu0
        %698 = vmatprep.mubr.bf16.mxu0 0
        %699 = vmatmul.mubr.bf16.gmra.mxu0 %v449
        %v700 = vpop.f32.mrf.mxu0
        %v701 = vadd.f32 %v304, %v700
        %v702 = vpop.f32.mrf.mxu0
        %v703 = vpop.f32.mrf.mxu0
        %v704 = vadd.f32 %v304, %v703
        %v705 = vpop.f32.mrf.mxu0
        %706 = vmatprep.mubr.bf16.mxu0 0
        %707 = vmatmul.mubr.bf16.gmra.mxu0 %v450
        %v708 = vpop.f32.mrf.mxu0
        %v709 = vadd.f32 %v304, %v708
        %v710 = vpop.f32.mrf.mxu0
        %v711 = vpop.f32.mrf.mxu0
        %v712 = vadd.f32 %v304, %v711
        %v713 = vpop.f32.mrf.mxu0
        %714 = vmatprep.mubr.bf16.mxu0 0
        %715 = vmatmul.mubr.bf16.gmra.mxu0 %v451
        %v716 = vpop.f32.mrf.mxu0
        %v717 = vadd.f32 %v304, %v716
        %v718 = vpop.f32.mrf.mxu0
        %v719 = vpop.f32.mrf.mxu0
        %v720 = vadd.f32 %v304, %v719
        %v721 = vpop.f32.mrf.mxu0
        %722 = vmatprep.mubr.bf16.mxu0 0
        %723 = vmatmul.mubr.bf16.gmra.mxu0 %v452
        %v724 = vpop.f32.mrf.mxu0
        %v725 = vadd.f32 %v304, %v724
        %v726 = vpop.f32.mrf.mxu0
        %v727 = vpop.f32.mrf.mxu0
        %v728 = vadd.f32 %v304, %v727
        %v729 = vpop.f32.mrf.mxu0
        %730 = vmatprep.mubr.bf16.mxu0 0
        %731 = vmatmul.mubr.bf16.gmra.mxu0 %v453
        %v732 = vpop.f32.mrf.mxu0
        %v733 = vadd.f32 %v304, %v732
        %v734 = vpop.f32.mrf.mxu0
        %v735 = vpop.f32.mrf.mxu0
        %v736 = vadd.f32 %v304, %v735
        %v737 = vpop.f32.mrf.mxu0
        %738 = vmatprep.mubr.bf16.mxu0 0
        %739 = vmatmul.mubr.bf16.gmra.mxu0 %v454
        %v740 = vpop.f32.mrf.mxu0
        %v741 = vadd.f32 %v304, %v740
        %v742 = vpop.f32.mrf.mxu0
        %v743 = vpop.f32.mrf.mxu0
        %v744 = vadd.f32 %v304, %v743
        %v745 = vpop.f32.mrf.mxu0
        %746 = vmatprep.mubr.bf16.mxu0 0
        %747 = vmatmul.mubr.bf16.gmra.mxu0 %v455
        %v748 = vpop.f32.mrf.mxu0
        %v749 = vadd.f32 %v304, %v748
        %v750 = vpop.f32.mrf.mxu0
        %v751 = vpop.f32.mrf.mxu0
        %v752 = vadd.f32 %v304, %v751
        %v753 = vpop.f32.mrf.mxu0
        %754 = vmatprep.mubr.bf16.mxu0 0
        %755 = vmatmul.mubr.bf16.gmra.mxu0 %v456
        %v756 = vpop.f32.mrf.mxu0
        %v757 = vadd.f32 %v304, %v756
        %v758 = vpop.f32.mrf.mxu0
        %v759 = vpop.f32.mrf.mxu0
        %v760 = vadd.f32 %v304, %v759
        %v761 = vpop.f32.mrf.mxu0
        %762 = vmatprep.mubr.bf16.mxu0 0
        %763 = vmatmul.mubr.bf16.gmra.mxu0 %v457
        %v764 = vpop.f32.mrf.mxu0
        %v765 = vadd.f32 %v304, %v764
        %v766 = vpop.f32.mrf.mxu0
        %v767 = vpop.f32.mrf.mxu0
        %v768 = vadd.f32 %v304, %v767
        %v769 = vpop.f32.mrf.mxu0
        %770 = vmatprep.mubr.bf16.mxu0 0
        %771 = vmatmul.mubr.bf16.gmra.mxu0 %v458
        %v772 = vpop.f32.mrf.mxu0
        %v773 = vadd.f32 %v304, %v772
        %v774 = vpop.f32.mrf.mxu0
        %v775 = vpop.f32.mrf.mxu0
        %v776 = vadd.f32 %v304, %v775
        %v777 = vpop.f32.mrf.mxu0
        %778 = vmatprep.mubr.bf16.mxu0 0
        %779 = vmatmul.mubr.bf16.gmra.mxu0 %v459
        %v780 = vpop.f32.mrf.mxu0
        %v781 = vadd.f32 %v304, %v780
        %v782 = vpop.f32.mrf.mxu0
        %v783 = vpop.f32.mrf.mxu0
        %v784 = vadd.f32 %v304, %v783
        %v785 = vpop.f32.mrf.mxu0
        %786 = vmatprep.mubr.bf16.mxu0 0
        %787 = vmatmul.mubr.bf16.gmra.mxu0 %v460
        %v788 = vpop.f32.mrf.mxu0
        %v789 = vadd.f32 %v304, %v788
        %v790 = vpop.f32.mrf.mxu0
        %v791 = vpop.f32.mrf.mxu0
        %v792 = vadd.f32 %v304, %v791
        %v793 = vpop.f32.mrf.mxu0
        %794 = vmatprep.mubr.bf16.mxu0 0
        %795 = vmatmul.mubr.bf16.gmra.mxu0 %v461
        %v796 = vpop.f32.mrf.mxu0
        %v797 = vadd.f32 %v304, %v796
        %v798 = vpop.f32.mrf.mxu0
        %v799 = vpop.f32.mrf.mxu0
        %v800 = vadd.f32 %v304, %v799
        %v801 = vpop.f32.mrf.mxu0
        %802 = vmatprep.mubr.bf16.mxu0 0
        %803 = vmatmul.mubr.bf16.gmra.mxu0 %v462
        %v804 = vpop.f32.mrf.mxu0
        %v805 = vadd.f32 %v304, %v804
        %v806 = vpop.f32.mrf.mxu0
        %v807 = vpop.f32.mrf.mxu0
        %v808 = vadd.f32 %v304, %v807
        %v809 = vpop.f32.mrf.mxu0
        %810 = vmatprep.mubr.bf16.mxu0 0
        %811 = vmatmul.mubr.bf16.gmra.mxu0 %v463
        %v812 = vpop.f32.mrf.mxu0
        %v813 = vadd.f32 %v304, %v812
        %v814 = vpop.f32.mrf.mxu0
        %v815 = vpop.f32.mrf.mxu0
        %v816 = vadd.f32 %v304, %v815
        %v817 = vpop.f32.mrf.mxu0
        %818 = vmatprep.mubr.bf16.mxu0 0
        %819 = vmatmul.mubr.bf16.gmra.mxu0 %v464
        %v820 = vpop.f32.mrf.mxu0
        %v821 = vadd.f32 %v304, %v820
        %v822 = vpop.f32.mrf.mxu0
        %v823 = vpop.f32.mrf.mxu0
        %v824 = vadd.f32 %v304, %v823
        %v825 = vpop.f32.mrf.mxu0
        %826 = vmatprep.mubr.bf16.mxu0 0
        %827 = vmatmul.mubr.bf16.gmra.mxu0 %v465
        %v828 = vpop.f32.mrf.mxu0
        %v829 = vadd.f32 %v304, %v828
        %v830 = vpop.f32.mrf.mxu0
        %v831 = vpop.f32.mrf.mxu0
        %v832 = vadd.f32 %v304, %v831
        %v833 = vpop.f32.mrf.mxu0
        %834 = vdwg.mxu0
        %vm835 = vcmp.gt.f32.partialorder %v581, 0.0
        %vm836 = vcmp.gt.f32.partialorder %v584, 0.0
        %vm837 = vcmp.gt.f32.partialorder %v589, 0.0
        %vm838 = vcmp.gt.f32.partialorder %v592, 0.0
        %vm839 = vcmp.gt.f32.partialorder %v597, 0.0
        %vm840 = vcmp.gt.f32.partialorder %v600, 0.0
        %vm841 = vcmp.gt.f32.partialorder %v605, 0.0
        %vm842 = vcmp.gt.f32.partialorder %v608, 0.0
        %vm843 = vcmp.gt.f32.partialorder %v613, 0.0
        %vm844 = vcmp.gt.f32.partialorder %v616, 0.0
        %vm845 = vcmp.gt.f32.partialorder %v621, 0.0
        %vm846 = vcmp.gt.f32.partialorder %v624, 0.0
        %vm847 = vcmp.gt.f32.partialorder %v629, 0.0
        %vm848 = vcmp.gt.f32.partialorder %v632, 0.0
        %vm849 = vcmp.gt.f32.partialorder %v637, 0.0
        %vm850 = vcmp.gt.f32.partialorder %v640, 0.0
        %vm851 = vcmp.gt.f32.partialorder %v645, 0.0
        %vm852 = vcmp.gt.f32.partialorder %v648, 0.0
        %vm853 = vcmp.gt.f32.partialorder %v653, 0.0
        %vm854 = vcmp.gt.f32.partialorder %v656, 0.0
        %vm855 = vcmp.gt.f32.partialorder %v661, 0.0
        %vm856 = vcmp.gt.f32.partialorder %v664, 0.0
        %vm857 = vcmp.gt.f32.partialorder %v669, 0.0
        %vm858 = vcmp.gt.f32.partialorder %v672, 0.0
        %vm859 = vcmp.gt.f32.partialorder %v677, 0.0
        %vm860 = vcmp.gt.f32.partialorder %v680, 0.0
        %vm861 = vcmp.gt.f32.partialorder %v685, 0.0
        %vm862 = vcmp.gt.f32.partialorder %v688, 0.0
        %vm863 = vcmp.gt.f32.partialorder %v693, 0.0
        %vm864 = vcmp.gt.f32.partialorder %v696, 0.0
        %vm865 = vcmp.gt.f32.partialorder %v701, 0.0
        %vm866 = vcmp.gt.f32.partialorder %v704, 0.0
        %vm867 = vcmp.gt.f32.partialorder %v709, 0.0
        %vm868 = vcmp.gt.f32.partialorder %v712, 0.0
        %vm869 = vcmp.gt.f32.partialorder %v717, 0.0
        %vm870 = vcmp.gt.f32.partialorder %v720, 0.0
        %vm871 = vcmp.gt.f32.partialorder %v725, 0.0
        %vm872 = vcmp.gt.f32.partialorder %v728, 0.0
        %vm873 = vcmp.gt.f32.partialorder %v733, 0.0
        %vm874 = vcmp.gt.f32.partialorder %v736, 0.0
        %vm875 = vcmp.gt.f32.partialorder %v741, 0.0
        %vm876 = vcmp.gt.f32.partialorder %v744, 0.0
        %vm877 = vcmp.gt.f32.partialorder %v749, 0.0
        %vm878 = vcmp.gt.f32.partialorder %v752, 0.0
        %vm879 = vcmp.gt.f32.partialorder %v757, 0.0
        %vm880 = vcmp.gt.f32.partialorder %v760, 0.0
        %vm881 = vcmp.gt.f32.partialorder %v765, 0.0
        %vm882 = vcmp.gt.f32.partialorder %v768, 0.0
        %vm883 = vcmp.gt.f32.partialorder %v773, 0.0
        %vm884 = vcmp.gt.f32.partialorder %v776, 0.0
        %vm885 = vcmp.gt.f32.partialorder %v781, 0.0
        %vm886 = vcmp.gt.f32.partialorder %v784, 0.0
        %vm887 = vcmp.gt.f32.partialorder %v789, 0.0
        %vm888 = vcmp.gt.f32.partialorder %v792, 0.0
        %vm889 = vcmp.gt.f32.partialorder %v797, 0.0
        %vm890 = vcmp.gt.f32.partialorder %v800, 0.0
        %vm891 = vcmp.gt.f32.partialorder %v805, 0.0
        %vm892 = vcmp.gt.f32.partialorder %v808, 0.0
        %vm893 = vcmp.gt.f32.partialorder %v813, 0.0
        %vm894 = vcmp.gt.f32.partialorder %v816, 0.0
        %vm895 = vcmp.gt.f32.partialorder %v821, 0.0
        %vm896 = vcmp.gt.f32.partialorder %v824, 0.0
        %vm897 = vcmp.gt.f32.partialorder %v829, 0.0
        %vm898 = vcmp.gt.f32.partialorder %v832, 0.0
        %v899 = vmin.f32 %v581, 0.0
        %v900 = vmin.f32 %v584, 0.0
        %v901 = vmin.f32 %v589, 0.0
        %v902 = vmin.f32 %v592, 0.0
        %v903 = vmin.f32 %v597, 0.0
        %v904 = vmin.f32 %v600, 0.0
        %v905 = vmin.f32 %v605, 0.0
        %v906 = vmin.f32 %v608, 0.0
        %v907 = vmin.f32 %v613, 0.0
        %v908 = vmin.f32 %v616, 0.0
        %v909 = vmin.f32 %v621, 0.0
        %v910 = vmin.f32 %v624, 0.0
        %v911 = vmin.f32 %v629, 0.0
        %v912 = vmin.f32 %v632, 0.0
        %v913 = vmin.f32 %v637, 0.0
        %v914 = vmin.f32 %v640, 0.0
        %v915 = vmin.f32 %v645, 0.0
        %v916 = vmin.f32 %v648, 0.0
        %v917 = vmin.f32 %v653, 0.0
        %v918 = vmin.f32 %v656, 0.0
        %v919 = vmin.f32 %v661, 0.0
        %v920 = vmin.f32 %v664, 0.0
        %v921 = vmin.f32 %v669, 0.0
        %v922 = vmin.f32 %v672, 0.0
        %v923 = vmin.f32 %v677, 0.0
        %v924 = vmin.f32 %v680, 0.0
        %v925 = vmin.f32 %v685, 0.0
        %v926 = vmin.f32 %v688, 0.0
        %v927 = vmin.f32 %v693, 0.0
        %v928 = vmin.f32 %v696, 0.0
        %v929 = vmin.f32 %v701, 0.0
        %v930 = vmin.f32 %v704, 0.0
        %v931 = vmin.f32 %v709, 0.0
        %v932 = vmin.f32 %v712, 0.0
        %v933 = vmin.f32 %v717, 0.0
        %v934 = vmin.f32 %v720, 0.0
        %v935 = vmin.f32 %v725, 0.0
        %v936 = vmin.f32 %v728, 0.0
        %v937 = vmin.f32 %v733, 0.0
        %v938 = vmin.f32 %v736, 0.0
        %v939 = vmin.f32 %v741, 0.0
        %v940 = vmin.f32 %v744, 0.0
        %v941 = vmin.f32 %v749, 0.0
        %v942 = vmin.f32 %v752, 0.0
        %v943 = vmin.f32 %v757, 0.0
        %v944 = vmin.f32 %v760, 0.0
        %v945 = vmin.f32 %v765, 0.0
        %v946 = vmin.f32 %v768, 0.0
        %v947 = vmin.f32 %v773, 0.0
        %v948 = vmin.f32 %v776, 0.0
        %v949 = vmin.f32 %v781, 0.0
        %v950 = vmin.f32 %v784, 0.0
        %v951 = vmin.f32 %v789, 0.0
        %v952 = vmin.f32 %v792, 0.0
        %v953 = vmin.f32 %v797, 0.0
        %v954 = vmin.f32 %v800, 0.0
        %v955 = vmin.f32 %v805, 0.0
        %v956 = vmin.f32 %v808, 0.0
        %v957 = vmin.f32 %v813, 0.0
        %v958 = vmin.f32 %v816, 0.0
        %v959 = vmin.f32 %v821, 0.0
        %v960 = vmin.f32 %v824, 0.0
        %v961 = vmin.f32 %v829, 0.0
        %v962 = vmin.f32 %v832, 0.0
        %v963 = vmul.f32 %v899, 1.442695
        %v964 = vpow.pop %v963
        %v965 = vmul.f32 %v900, 1.442695
        %v966 = vpow.pop %v965
        %v967 = vmul.f32 %v901, 1.442695
        %v968 = vpow.pop %v967
        %v969 = vmul.f32 %v902, 1.442695
        %v970 = vpow.pop %v969
        %v971 = vmul.f32 %v903, 1.442695
        %v972 = vpow.pop %v971
        %v973 = vmul.f32 %v904, 1.442695
        %v974 = vpow.pop %v973
        %v975 = vmul.f32 %v905, 1.442695
        %v976 = vpow.pop %v975
        %v977 = vmul.f32 %v906, 1.442695
        %v978 = vpow.pop %v977
        %v979 = vmul.f32 %v907, 1.442695
        %v980 = vpow.pop %v979
        %v981 = vmul.f32 %v908, 1.442695
        %v982 = vpow.pop %v981
        %v983 = vmul.f32 %v909, 1.442695
        %v984 = vpow.pop %v983
        %v985 = vmul.f32 %v910, 1.442695
        %v986 = vpow.pop %v985
        %v987 = vmul.f32 %v911, 1.442695
        %v988 = vpow.pop %v987
        %v989 = vmul.f32 %v912, 1.442695
        %v990 = vpow.pop %v989
        %v991 = vmul.f32 %v913, 1.442695
        %v992 = vpow.pop %v991
        %v993 = vmul.f32 %v914, 1.442695
        %v994 = vpow.pop %v993
        %v995 = vmul.f32 %v915, 1.442695
        %v996 = vpow.pop %v995
        %v997 = vmul.f32 %v916, 1.442695
        %v998 = vpow.pop %v997
        %v999 = vmul.f32 %v917, 1.442695
        %v1000 = vpow.pop %v999
        %v1001 = vmul.f32 %v918, 1.442695
        %v1002 = vpow.pop %v1001
        %v1003 = vmul.f32 %v919, 1.442695
        %v1004 = vpow.pop %v1003
        %v1005 = vmul.f32 %v920, 1.442695
        %v1006 = vpow.pop %v1005
        %v1007 = vmul.f32 %v921, 1.442695
        %v1008 = vpow.pop %v1007
        %v1009 = vmul.f32 %v922, 1.442695
        %v1010 = vpow.pop %v1009
        %v1011 = vmul.f32 %v923, 1.442695
        %v1012 = vpow.pop %v1011
        %v1013 = vmul.f32 %v924, 1.442695
        %v1014 = vpow.pop %v1013
        %v1015 = vmul.f32 %v925, 1.442695
        %v1016 = vpow.pop %v1015
        %v1017 = vmul.f32 %v926, 1.442695
        %v1018 = vpow.pop %v1017
        %v1019 = vmul.f32 %v927, 1.442695
        %v1020 = vpow.pop %v1019
        %v1021 = vmul.f32 %v928, 1.442695
        %v1022 = vpow.pop %v1021
        %v1023 = vmul.f32 %v929, 1.442695
        %v1024 = vpow.pop %v1023
        %v1025 = vmul.f32 %v930, 1.442695
        %v1026 = vpow.pop %v1025
        %v1027 = vmul.f32 %v931, 1.442695
        %v1028 = vpow.pop %v1027
        %v1029 = vmul.f32 %v932, 1.442695
        %v1030 = vpow.pop %v1029
        %v1031 = vmul.f32 %v933, 1.442695
        %v1032 = vpow.pop %v1031
        %v1033 = vmul.f32 %v934, 1.442695
        %v1034 = vpow.pop %v1033
        %v1035 = vmul.f32 %v935, 1.442695
        %v1036 = vpow.pop %v1035
        %v1037 = vmul.f32 %v936, 1.442695
        %v1038 = vpow.pop %v1037
        %v1039 = vmul.f32 %v937, 1.442695
        %v1040 = vpow.pop %v1039
        %v1041 = vmul.f32 %v938, 1.442695
        %v1042 = vpow.pop %v1041
        %v1043 = vmul.f32 %v939, 1.442695
        %v1044 = vpow.pop %v1043
        %v1045 = vmul.f32 %v940, 1.442695
        %v1046 = vpow.pop %v1045
        %v1047 = vmul.f32 %v941, 1.442695
        %v1048 = vpow.pop %v1047
        %v1049 = vmul.f32 %v942, 1.442695
        %v1050 = vpow.pop %v1049
        %v1051 = vmul.f32 %v943, 1.442695
        %v1052 = vpow.pop %v1051
        %v1053 = vmul.f32 %v944, 1.442695
        %v1054 = vpow.pop %v1053
        %v1055 = vmul.f32 %v945, 1.442695
        %v1056 = vpow.pop %v1055
        %v1057 = vmul.f32 %v946, 1.442695
        %v1058 = vpow.pop %v1057
        %v1059 = vmul.f32 %v947, 1.442695
        %v1060 = vpow.pop %v1059
        %v1061 = vmul.f32 %v948, 1.442695
        %v1062 = vpow.pop %v1061
        %v1063 = vmul.f32 %v949, 1.442695
        %v1064 = vpow.pop %v1063
        %v1065 = vmul.f32 %v950, 1.442695
        %v1066 = vpow.pop %v1065
        %v1067 = vmul.f32 %v951, 1.442695
        %v1068 = vpow.pop %v1067
        %v1069 = vmul.f32 %v952, 1.442695
        %v1070 = vpow.pop %v1069
        %v1071 = vmul.f32 %v953, 1.442695
        %v1072 = vpow.pop %v1071
        %v1073 = vmul.f32 %v954, 1.442695
        %v1074 = vpow.pop %v1073
        %v1075 = vmul.f32 %v955, 1.442695
        %v1076 = vpow.pop %v1075
        %v1077 = vmul.f32 %v956, 1.442695
        %v1078 = vpow.pop %v1077
        %v1079 = vmul.f32 %v957, 1.442695
        %v1080 = vpow.pop %v1079
        %v1081 = vmul.f32 %v958, 1.442695
        %v1082 = vpow.pop %v1081
        %v1083 = vmul.f32 %v959, 1.442695
        %v1084 = vpow.pop %v1083
        %v1085 = vmul.f32 %v960, 1.442695
        %v1086 = vpow.pop %v1085
        %v1087 = vmul.f32 %v961, 1.442695
        %v1088 = vpow.pop %v1087
        %v1089 = vmul.f32 %v962, 1.442695
        %v1090 = vpow.pop %v1089
        %v1091 = vsub.f32 %v964, 1.0
        %v1092 = vsub.f32 %v966, 1.0
        %v1093 = vsub.f32 %v968, 1.0
        %v1094 = vsub.f32 %v970, 1.0
        %v1095 = vsub.f32 %v972, 1.0
        %v1096 = vsub.f32 %v974, 1.0
        %v1097 = vsub.f32 %v976, 1.0
        %v1098 = vsub.f32 %v978, 1.0
        %v1099 = vsub.f32 %v980, 1.0
        %v1100 = vsub.f32 %v982, 1.0
        %v1101 = vsub.f32 %v984, 1.0
        %v1102 = vsub.f32 %v986, 1.0
        %v1103 = vsub.f32 %v988, 1.0
        %v1104 = vsub.f32 %v990, 1.0
        %v1105 = vsub.f32 %v992, 1.0
        %v1106 = vsub.f32 %v994, 1.0
        %v1107 = vsub.f32 %v996, 1.0
        %v1108 = vsub.f32 %v998, 1.0
        %v1109 = vsub.f32 %v1000, 1.0
        %v1110 = vsub.f32 %v1002, 1.0
        %v1111 = vsub.f32 %v1004, 1.0
        %v1112 = vsub.f32 %v1006, 1.0
        %v1113 = vsub.f32 %v1008, 1.0
        %v1114 = vsub.f32 %v1010, 1.0
        %v1115 = vsub.f32 %v1012, 1.0
        %v1116 = vsub.f32 %v1014, 1.0
        %v1117 = vsub.f32 %v1016, 1.0
        %v1118 = vsub.f32 %v1018, 1.0
        %v1119 = vsub.f32 %v1020, 1.0
        %v1120 = vsub.f32 %v1022, 1.0
        %v1121 = vsub.f32 %v1024, 1.0
        %v1122 = vsub.f32 %v1026, 1.0
        %v1123 = vsub.f32 %v1028, 1.0
        %v1124 = vsub.f32 %v1030, 1.0
        %v1125 = vsub.f32 %v1032, 1.0
        %v1126 = vsub.f32 %v1034, 1.0
        %v1127 = vsub.f32 %v1036, 1.0
        %v1128 = vsub.f32 %v1038, 1.0
        %v1129 = vsub.f32 %v1040, 1.0
        %v1130 = vsub.f32 %v1042, 1.0
        %v1131 = vsub.f32 %v1044, 1.0
        %v1132 = vsub.f32 %v1046, 1.0
        %v1133 = vsub.f32 %v1048, 1.0
        %v1134 = vsub.f32 %v1050, 1.0
        %v1135 = vsub.f32 %v1052, 1.0
        %v1136 = vsub.f32 %v1054, 1.0
        %v1137 = vsub.f32 %v1056, 1.0
        %v1138 = vsub.f32 %v1058, 1.0
        %v1139 = vsub.f32 %v1060, 1.0
        %v1140 = vsub.f32 %v1062, 1.0
        %v1141 = vsub.f32 %v1064, 1.0
        %v1142 = vsub.f32 %v1066, 1.0
        %v1143 = vsub.f32 %v1068, 1.0
        %v1144 = vsub.f32 %v1070, 1.0
        %v1145 = vsub.f32 %v1072, 1.0
        %v1146 = vsub.f32 %v1074, 1.0
        %v1147 = vsub.f32 %v1076, 1.0
        %v1148 = vsub.f32 %v1078, 1.0
        %v1149 = vsub.f32 %v1080, 1.0
        %v1150 = vsub.f32 %v1082, 1.0
        %v1151 = vsub.f32 %v1084, 1.0
        %v1152 = vsub.f32 %v1086, 1.0
        %v1153 = vsub.f32 %v1088, 1.0
        %v1154 = vsub.f32 %v1090, 1.0
        %v1155 = vsel %vm835, %v581, %v1091
        %v1156 = vsel %vm836, %v584, %v1092
        %v1157 = vsel %vm837, %v589, %v1093
        %v1158 = vsel %vm838, %v592, %v1094
        %v1159 = vsel %vm839, %v597, %v1095
        %v1160 = vsel %vm840, %v600, %v1096
        %v1161 = vsel %vm841, %v605, %v1097
        %v1162 = vsel %vm842, %v608, %v1098
        %v1163 = vsel %vm843, %v613, %v1099
        %v1164 = vsel %vm844, %v616, %v1100
        %v1165 = vsel %vm845, %v621, %v1101
        %v1166 = vsel %vm846, %v624, %v1102
        %v1167 = vsel %vm847, %v629, %v1103
        %v1168 = vsel %vm848, %v632, %v1104
        %v1169 = vsel %vm849, %v637, %v1105
        %v1170 = vsel %vm850, %v640, %v1106
        %v1171 = vsel %vm851, %v645, %v1107
        %v1172 = vsel %vm852, %v648, %v1108
        %v1173 = vsel %vm853, %v653, %v1109
        %v1174 = vsel %vm854, %v656, %v1110
        %v1175 = vsel %vm855, %v661, %v1111
        %v1176 = vsel %vm856, %v664, %v1112
        %v1177 = vsel %vm857, %v669, %v1113
        %v1178 = vsel %vm858, %v672, %v1114
        %v1179 = vsel %vm859, %v677, %v1115
        %v1180 = vsel %vm860, %v680, %v1116
        %v1181 = vsel %vm861, %v685, %v1117
        %v1182 = vsel %vm862, %v688, %v1118
        %v1183 = vsel %vm863, %v693, %v1119
        %v1184 = vsel %vm864, %v696, %v1120
        %v1185 = vsel %vm865, %v701, %v1121
        %v1186 = vsel %vm866, %v704, %v1122
        %v1187 = vsel %vm867, %v709, %v1123
        %v1188 = vsel %vm868, %v712, %v1124
        %v1189 = vsel %vm869, %v717, %v1125
        %v1190 = vsel %vm870, %v720, %v1126
        %v1191 = vsel %vm871, %v725, %v1127
        %v1192 = vsel %vm872, %v728, %v1128
        %v1193 = vsel %vm873, %v733, %v1129
        %v1194 = vsel %vm874, %v736, %v1130
        %v1195 = vsel %vm875, %v741, %v1131
        %v1196 = vsel %vm876, %v744, %v1132
        %v1197 = vsel %vm877, %v749, %v1133
        %v1198 = vsel %vm878, %v752, %v1134
        %v1199 = vsel %vm879, %v757, %v1135
        %v1200 = vsel %vm880, %v760, %v1136
        %v1201 = vsel %vm881, %v765, %v1137
        %v1202 = vsel %vm882, %v768, %v1138
        %v1203 = vsel %vm883, %v773, %v1139
        %v1204 = vsel %vm884, %v776, %v1140
        %v1205 = vsel %vm885, %v781, %v1141
        %v1206 = vsel %vm886, %v784, %v1142
        %v1207 = vsel %vm887, %v789, %v1143
        %v1208 = vsel %vm888, %v792, %v1144
        %v1209 = vsel %vm889, %v797, %v1145
        %v1210 = vsel %vm890, %v800, %v1146
        %v1211 = vsel %vm891, %v805, %v1147
        %v1212 = vsel %vm892, %v808, %v1148
        %v1213 = vsel %vm893, %v813, %v1149
        %v1214 = vsel %vm894, %v816, %v1150
        %v1215 = vsel %vm895, %v821, %v1151
        %v1216 = vsel %vm896, %v824, %v1152
        %v1217 = vsel %vm897, %v829, %v1153
        %v1218 = vsel %vm898, %v832, %v1154
        %v1219 = vpack.c.bf16 %v1156, %v1155
        %v1220 = vpack.c.bf16 %v1158, %v1157
        %v1221 = vpack.c.bf16 %v1160, %v1159
        %v1222 = vpack.c.bf16 %v1162, %v1161
        %v1223 = vpack.c.bf16 %v1164, %v1163
        %v1224 = vpack.c.bf16 %v1166, %v1165
        %v1225 = vpack.c.bf16 %v1168, %v1167
        %v1226 = vpack.c.bf16 %v1170, %v1169
        %v1227 = vpack.c.bf16 %v1172, %v1171
        %v1228 = vpack.c.bf16 %v1174, %v1173
        %v1229 = vpack.c.bf16 %v1176, %v1175
        %v1230 = vpack.c.bf16 %v1178, %v1177
        %v1231 = vpack.c.bf16 %v1180, %v1179
        %v1232 = vpack.c.bf16 %v1182, %v1181
        %v1233 = vpack.c.bf16 %v1184, %v1183
        %v1234 = vpack.c.bf16 %v1186, %v1185
        %v1235 = vpack.c.bf16 %v1188, %v1187
        %v1236 = vpack.c.bf16 %v1190, %v1189
        %v1237 = vpack.c.bf16 %v1192, %v1191
        %v1238 = vpack.c.bf16 %v1194, %v1193
        %v1239 = vpack.c.bf16 %v1196, %v1195
        %v1240 = vpack.c.bf16 %v1198, %v1197
        %v1241 = vpack.c.bf16 %v1200, %v1199
        %v1242 = vpack.c.bf16 %v1202, %v1201
        %v1243 = vpack.c.bf16 %v1204, %v1203
        %v1244 = vpack.c.bf16 %v1206, %v1205
        %v1245 = vpack.c.bf16 %v1208, %v1207
        %v1246 = vpack.c.bf16 %v1210, %v1209
        %v1247 = vpack.c.bf16 %v1212, %v1211
        %v1248 = vpack.c.bf16 %v1214, %v1213
        %v1249 = vpack.c.bf16 %v1216, %v1215
        %v1250 = vpack.c.bf16 %v1218, %v1217
        %v1283 = vunpack.c.l.b16 %v1219
        %v1284 = vunpack.c.h.b16 %v1219
        %v1285 = vunpack.c.l.b16 %v1220
        %v1286 = vunpack.c.h.b16 %v1220
        %v1287 = vunpack.c.l.b16 %v1221
        %v1288 = vunpack.c.h.b16 %v1221
        %v1289 = vunpack.c.l.b16 %v1222
        %v1290 = vunpack.c.h.b16 %v1222
        %v1291 = vunpack.c.l.b16 %v1223
        %v1292 = vunpack.c.h.b16 %v1223
        %v1293 = vunpack.c.l.b16 %v1224
        %v1294 = vunpack.c.h.b16 %v1224
        %v1295 = vunpack.c.l.b16 %v1225
        %v1296 = vunpack.c.h.b16 %v1225
        %v1297 = vunpack.c.l.b16 %v1226
        %v1298 = vunpack.c.h.b16 %v1226
        %v1299 = vunpack.c.l.b16 %v1227
        %v1300 = vunpack.c.h.b16 %v1227
        %v1301 = vunpack.c.l.b16 %v1228
        %v1302 = vunpack.c.h.b16 %v1228
        %v1303 = vunpack.c.l.b16 %v1229
        %v1304 = vunpack.c.h.b16 %v1229
        %v1305 = vunpack.c.l.b16 %v1230
        %v1306 = vunpack.c.h.b16 %v1230
        %v1307 = vunpack.c.l.b16 %v1231
        %v1308 = vunpack.c.h.b16 %v1231
        %v1309 = vunpack.c.l.b16 %v1232
        %v1310 = vunpack.c.h.b16 %v1232
        %v1311 = vunpack.c.l.b16 %v1233
        %v1312 = vunpack.c.h.b16 %v1233
        %v1313 = vunpack.c.l.b16 %v1234
        %v1314 = vunpack.c.h.b16 %v1234
        %v1315 = vunpack.c.l.b16 %v1235
        %v1316 = vunpack.c.h.b16 %v1235
        %v1317 = vunpack.c.l.b16 %v1236
        %v1318 = vunpack.c.h.b16 %v1236
        %v1319 = vunpack.c.l.b16 %v1237
        %v1320 = vunpack.c.h.b16 %v1237
        %v1321 = vunpack.c.l.b16 %v1238
        %v1322 = vunpack.c.h.b16 %v1238
        %v1323 = vunpack.c.l.b16 %v1239
        %v1324 = vunpack.c.h.b16 %v1239
        %v1325 = vunpack.c.l.b16 %v1240
        %v1326 = vunpack.c.h.b16 %v1240
        %v1327 = vunpack.c.l.b16 %v1241
        %v1328 = vunpack.c.h.b16 %v1241
        %v1329 = vunpack.c.l.b16 %v1242
        %v1330 = vunpack.c.h.b16 %v1242
        %v1331 = vunpack.c.l.b16 %v1243
        %v1332 = vunpack.c.h.b16 %v1243
        %v1333 = vunpack.c.l.b16 %v1244
        %v1334 = vunpack.c.h.b16 %v1244
        %v1335 = vunpack.c.l.b16 %v1245
        %v1336 = vunpack.c.h.b16 %v1245
        %v1337 = vunpack.c.l.b16 %v1246
        %v1338 = vunpack.c.h.b16 %v1246
        %v1339 = vunpack.c.l.b16 %v1247
        %v1340 = vunpack.c.h.b16 %v1247
        %v1341 = vunpack.c.l.b16 %v1248
        %v1342 = vunpack.c.h.b16 %v1248
        %v1343 = vunpack.c.l.b16 %v1249
        %v1344 = vunpack.c.h.b16 %v1249
        %v1345 = vunpack.c.l.b16 %v1250
        %v1346 = vunpack.c.h.b16 %v1250
        %v1347 = vpack.c.b16 %v1283, %v1283
        %v1348 = vpack.c.b16 %v1284, %v1284
        %v1349 = vpack.c.b16 %v1285, %v1285
        %v1350 = vpack.c.b16 %v1286, %v1286
        %v1351 = vpack.c.b16 %v1287, %v1287
        %v1352 = vpack.c.b16 %v1288, %v1288
        %v1353 = vpack.c.b16 %v1289, %v1289
        %v1354 = vpack.c.b16 %v1290, %v1290
        %v1355 = vpack.c.b16 %v1291, %v1291
        %v1356 = vpack.c.b16 %v1292, %v1292
        %v1357 = vpack.c.b16 %v1293, %v1293
        %v1358 = vpack.c.b16 %v1294, %v1294
        %v1359 = vpack.c.b16 %v1295, %v1295
        %v1360 = vpack.c.b16 %v1296, %v1296
        %v1361 = vpack.c.b16 %v1297, %v1297
        %v1362 = vpack.c.b16 %v1298, %v1298
        %v1363 = vpack.c.b16 %v1299, %v1299
        %v1364 = vpack.c.b16 %v1300, %v1300
        %v1365 = vpack.c.b16 %v1301, %v1301
        %v1366 = vpack.c.b16 %v1302, %v1302
        %v1367 = vpack.c.b16 %v1303, %v1303
        %v1368 = vpack.c.b16 %v1304, %v1304
        %v1369 = vpack.c.b16 %v1305, %v1305
        %v1370 = vpack.c.b16 %v1306, %v1306
        %v1371 = vpack.c.b16 %v1307, %v1307
        %v1372 = vpack.c.b16 %v1308, %v1308
        %v1373 = vpack.c.b16 %v1309, %v1309
        %v1374 = vpack.c.b16 %v1310, %v1310
        %v1375 = vpack.c.b16 %v1311, %v1311
        %v1376 = vpack.c.b16 %v1312, %v1312
        %v1377 = vpack.c.b16 %v1313, %v1313
        %v1378 = vpack.c.b16 %v1314, %v1314
        %v1379 = vpack.c.b16 %v1315, %v1315
        %v1380 = vpack.c.b16 %v1316, %v1316
        %v1381 = vpack.c.b16 %v1317, %v1317
        %v1382 = vpack.c.b16 %v1318, %v1318
        %v1383 = vpack.c.b16 %v1319, %v1319
        %v1384 = vpack.c.b16 %v1320, %v1320
        %v1385 = vpack.c.b16 %v1321, %v1321
        %v1386 = vpack.c.b16 %v1322, %v1322
        %v1387 = vpack.c.b16 %v1323, %v1323
        %v1388 = vpack.c.b16 %v1324, %v1324
        %v1389 = vpack.c.b16 %v1325, %v1325
        %v1390 = vpack.c.b16 %v1326, %v1326
        %v1391 = vpack.c.b16 %v1327, %v1327
        %v1392 = vpack.c.b16 %v1328, %v1328
        %v1393 = vpack.c.b16 %v1329, %v1329
        %v1394 = vpack.c.b16 %v1330, %v1330
        %v1395 = vpack.c.b16 %v1331, %v1331
        %v1396 = vpack.c.b16 %v1332, %v1332
        %v1397 = vpack.c.b16 %v1333, %v1333
        %v1398 = vpack.c.b16 %v1334, %v1334
        %v1399 = vpack.c.b16 %v1335, %v1335
        %v1400 = vpack.c.b16 %v1336, %v1336
        %v1401 = vpack.c.b16 %v1337, %v1337
        %v1402 = vpack.c.b16 %v1338, %v1338
        %v1403 = vpack.c.b16 %v1339, %v1339
        %v1404 = vpack.c.b16 %v1340, %v1340
        %v1405 = vpack.c.b16 %v1341, %v1341
        %v1406 = vpack.c.b16 %v1342, %v1342
        %v1407 = vpack.c.b16 %v1343, %v1343
        %v1408 = vpack.c.b16 %v1344, %v1344
        %v1409 = vpack.c.b16 %v1345, %v1345
        %v1410 = vpack.c.b16 %v1346, %v1346
        %1475 = vst [vmem:[%s215] sm:$0xf] %v1347
        %1476 = vst [vmem:[%s215 + $0x4] sm:$0xf] %v1348
        %1477 = vst [vmem:[%s215 + $0x8] sm:$0xf] %v1349
        %1478 = vst [vmem:[%s215 + $0xc] sm:$0xf] %v1350
        %1479 = vst [vmem:[%s215 + $0x10] sm:$0xf] %v1351
        %1480 = vst [vmem:[%s215 + $0x14] sm:$0xf] %v1352
        %1481 = vst [vmem:[%s215 + $0x18] sm:$0xf] %v1353
        %1482 = vst [vmem:[%s215 + $0x1c] sm:$0xf] %v1354
        %1483 = vst [vmem:[%s215 + $0x20] sm:$0xf] %v1355
        %1484 = vst [vmem:[%s215 + $0x24] sm:$0xf] %v1356
        %1485 = vst [vmem:[%s215 + $0x28] sm:$0xf] %v1357
        %1486 = vst [vmem:[%s215 + $0x2c] sm:$0xf] %v1358
        %1487 = vst [vmem:[%s215 + $0x30] sm:$0xf] %v1359
        %1488 = vst [vmem:[%s215 + $0x34] sm:$0xf] %v1360
        %1489 = vst [vmem:[%s215 + $0x38] sm:$0xf] %v1361
        %1490 = vst [vmem:[%s215 + $0x3c] sm:$0xf] %v1362
        %1491 = vst [vmem:[%s215 + $0x40] sm:$0xf] %v1363
        %1492 = vst [vmem:[%s215 + $0x44] sm:$0xf] %v1364
        %1493 = vst [vmem:[%s215 + $0x48] sm:$0xf] %v1365
        %1494 = vst [vmem:[%s215 + $0x4c] sm:$0xf] %v1366
        %1495 = vst [vmem:[%s215 + $0x50] sm:$0xf] %v1367
        %1496 = vst [vmem:[%s215 + $0x54] sm:$0xf] %v1368
        %1497 = vst [vmem:[%s215 + $0x58] sm:$0xf] %v1369
        %1498 = vst [vmem:[%s215 + $0x5c] sm:$0xf] %v1370
        %1499 = vst [vmem:[%s215 + $0x60] sm:$0xf] %v1371
        %1500 = vst [vmem:[%s215 + $0x64] sm:$0xf] %v1372
        %1501 = vst [vmem:[%s215 + $0x68] sm:$0xf] %v1373
        %1502 = vst [vmem:[%s215 + $0x6c] sm:$0xf] %v1374
        %1503 = vst [vmem:[%s215 + $0x70] sm:$0xf] %v1375
        %1504 = vst [vmem:[%s215 + $0x74] sm:$0xf] %v1376
        %1505 = vst [vmem:[%s215 + $0x78] sm:$0xf] %v1377
        %1506 = vst [vmem:[%s215 + $0x7c] sm:$0xf] %v1378
        %1507 = vst [vmem:[%s215 + $0x80] sm:$0xf] %v1379
        %1508 = vst [vmem:[%s215 + $0x84] sm:$0xf] %v1380
        %1509 = vst [vmem:[%s215 + $0x88] sm:$0xf] %v1381
        %1510 = vst [vmem:[%s215 + $0x8c] sm:$0xf] %v1382
        %1511 = vst [vmem:[%s215 + $0x90] sm:$0xf] %v1383
        %1512 = vst [vmem:[%s215 + $0x94] sm:$0xf] %v1384
        %1513 = vst [vmem:[%s215 + $0x98] sm:$0xf] %v1385
        %1514 = vst [vmem:[%s215 + $0x9c] sm:$0xf] %v1386
        %1515 = vst [vmem:[%s215 + $0xa0] sm:$0xf] %v1387
        %1516 = vst [vmem:[%s215 + $0xa4] sm:$0xf] %v1388
        %1517 = vst [vmem:[%s215 + $0xa8] sm:$0xf] %v1389
        %1518 = vst [vmem:[%s215 + $0xac] sm:$0xf] %v1390
        %1519 = vst [vmem:[%s215 + $0xb0] sm:$0xf] %v1391
        %1520 = vst [vmem:[%s215 + $0xb4] sm:$0xf] %v1392
        %1521 = vst [vmem:[%s215 + $0xb8] sm:$0xf] %v1393
        %1522 = vst [vmem:[%s215 + $0xbc] sm:$0xf] %v1394
        %1523 = vst [vmem:[%s215 + $0xc0] sm:$0xf] %v1395
        %1524 = vst [vmem:[%s215 + $0xc4] sm:$0xf] %v1396
        %1525 = vst [vmem:[%s215 + $0xc8] sm:$0xf] %v1397
        %1526 = vst [vmem:[%s215 + $0xcc] sm:$0xf] %v1398
        %1527 = vst [vmem:[%s215 + $0xd0] sm:$0xf] %v1399
        %1528 = vst [vmem:[%s215 + $0xd4] sm:$0xf] %v1400
        %1529 = vst [vmem:[%s215 + $0xd8] sm:$0xf] %v1401
        %1530 = vst [vmem:[%s215 + $0xdc] sm:$0xf] %v1402
        %1531 = vst [vmem:[%s215 + $0xe0] sm:$0xf] %v1403
        %1532 = vst [vmem:[%s215 + $0xe4] sm:$0xf] %v1404
        %1533 = vst [vmem:[%s215 + $0xe8] sm:$0xf] %v1405
        %1534 = vst [vmem:[%s215 + $0xec] sm:$0xf] %v1406
        %1535 = vst [vmem:[%s215 + $0xf0] sm:$0xf] %v1407
        %1536 = vst [vmem:[%s215 + $0xf4] sm:$0xf] %v1408
        %1537 = vst [vmem:[%s215 + $0xf8] sm:$0xf] %v1409
        %1538 = vst [vmem:[%s215 + $0xfc] sm:$0xf] %v1410
        %s1539 = sand.u32 %s97, 1
        %s1540 = scalar_lea.sflag [#allocation4], %s1539
        %s1541 = sand.u32 %s97, 1
        %s1542 = smul.addr %s1541, 256
        %s1543 = scalar_lea.vmem [#allocation8], %s1542
        // Predicated region
        $region45: #{tpu_custom_call.1} parent=31 // pred_check
          %p1544 = pneg %p107
        $region46: #{tpu_custom_call.1} parent=31 // pred_check_branch
          %1546 = sbr.rel (%p1544) target = $region48
        $region47: #{tpu_custom_call.1} parent=31 // pred_region
          %s1547 = smul.u32 64, %s21
          %s1549 = ssub.s32 4096, 4096
          %1550 = vsyncadd %s1540, %s1549
          %s1551 = smul.addr %s1547, 64
          %s1552 = scalar_lea.hbm %s3, %s1551
          %s1553 = sshll.u32 %s1543, 4
          %s1554 = int_to_ptr.vmem [resolvable:$true] %s1553
          %1559 = dma.vmem_to_hbm [thread:$0]  %s1554, 4096, %s1552, %s1540, 64, 64, 4
        $region48: #{tpu_custom_call.1} parent=31 // pred_fallthru
          _
      $region32: #{tpu_custom_call.1} parent=5 // pred_fallthru
        _
      %p1560 = scmp.le.s32.totalorder 2, %s16
      // Predicated region
      $region49: #{tpu_custom_call.1} parent=5 // pred_check
        %p1561 = pneg %p1560
      $region50: #{tpu_custom_call.1} parent=5 // pred_check_branch
        %1563 = sbr.rel (%p1561) target = $region52
      $region51: #{tpu_custom_call.1} parent=5 // pred_region
        %s1564 = ssub.s32 %s16, 2
        // Predicated region
        $region53: #{tpu_custom_call.1} parent=51 // pred_check
          %p1565 = pneg %p113
        $region54: #{tpu_custom_call.1} parent=51 // pred_check_branch
          %1567 = sbr.rel (%p1565) target = $region56
        $region55: #{tpu_custom_call.1} parent=51 // pred_region
          %s1568 = sand.u32 %s98, 1
          %s1569 = scalar_lea.sflag [#allocation4], %s1568
          %s1570 = sand.u32 %s98, 1
          %s1571 = smul.addr %s1570, 256
          %s1572 = scalar_lea.vmem [#allocation8], %s1571
          %1573 = dma.done %s1569, 4096
        $region56: #{tpu_custom_call.1} parent=51 // pred_fallthru
          _
      $region52: #{tpu_custom_call.1} parent=5 // pred_fallthru
        _
    $region6: #{tpu_custom_call.1} parent=1 // loop_footer
      %s20 = sadd.s32 1, %s16
    $region7: #{tpu_custom_call.1} parent=1 // loop_footer_branch
      %15 = sbr.rel target = $region3
    $region8: #{tpu_custom_call.1} parent=1 // loop_exit
      _
    %1574 = vsyncpa [#allocation3], 1
    %s1575 = scalar_lea.sflag [#allocation3], 1
    %1576 = vsyncpa %s1575, 1
    %1577 = vsyncpa [#allocation6], 1
    %1578 = vsyncpa [#allocation4], 1
    %s1579 = scalar_lea.sflag [#allocation4], 1
    %1580 = vsyncpa %s1579, 1

</llo_original>
